<compile_context>
chip_gen: v7x
topology: tpu7x:2x2x1
jax: 0.10.0
libtpu: 0.0.40
codegen_flags: <defaults>
</compile_context>

<pallas_src>
import functools

import jax
import jax.numpy as jnp
from jax.experimental import pallas as pl
from jax.experimental.pallas import tpu as pltpu

EPS = 1e-5


def _round_up(x, m):
    return (x + m - 1) // m * m


# ----------------------------- Pallas kernels --------------------------------

def _gemm_bn_stats_kernel(a_ref, b_ref, o_ref, stats_ref, *, m_valid, tm):
    """K-tiled bf16 GEMM accumulated into the f32 output block; on the last K step,
    emit per-M-tile BN partial stats [sum; sum_sq; 0...] as an (8, C) slab."""
    i = pl.program_id(0)
    k = pl.program_id(1)
    nk = pl.num_programs(1)

    @pl.when(k == 0)
    def _():
        o_ref[...] = jnp.zeros_like(o_ref)

    o_ref[...] += jnp.dot(a_ref[...], b_ref[...],
                          preferred_element_type=jnp.float32)

    @pl.when(k == nk - 1)
    def _():
        y = o_ref[...]
        if m_valid % tm != 0:  # static: mask only exists when there is a partial tile
            rows = jax.lax.broadcasted_iota(jnp.int32, y.shape, 0) + i * tm
            y = jnp.where(rows < m_valid, y, 0.0)
        s = jnp.sum(y, axis=0, keepdims=True)
        s2 = jnp.sum(y * y, axis=0, keepdims=True)
        row = jax.lax.broadcasted_iota(jnp.int32, (8, y.shape[1]), 0)
        stats_ref[...] = jnp.where(row == 0, s, jnp.where(row == 1, s2, 0.0))


def _bn_relu_kernel(y_ref, s_ref, sh_ref, o_ref):
    o_ref[...] = jnp.maximum(y_ref[...] * s_ref[...] + sh_ref[...], 0.0)


def _add_bn_relu_kernel(y_ref, s_ref, sh_ref, z_ref, zs_ref, zsh_ref, o_ref):
    o_ref[...] = jnp.maximum(
        y_ref[...] * s_ref[...] + sh_ref[...]
        + z_ref[...] * zs_ref[...] + zsh_ref[...], 0.0)


# ----------------------------- Pallas wrappers --------------------------------

def conv_gemm_with_stats(a, bmat, tm_max=256):
    """a: (M, Kp) bf16 patches, bmat: (Kp, Cp) bf16 weights (Kp, Cp lane-aligned).
    Returns f32 pre-BN activations (M, Cp) and f32 (2, Cp) [sum, sum_sq] over rows."""
    m, kp = a.shape
    cp = bmat.shape[1]
    tm = min(tm_max, _round_up(m, 8))
    tk = kp if kp <= 512 else 512          # kp is a multiple of tk by construction
    nm, nk = pl.cdiv(m, tm), kp // tk
    kern = functools.partial(_gemm_bn_stats_kernel, m_valid=m, tm=tm)
    y, stats = pl.pallas_call(
        kern,
        out_shape=(jax.ShapeDtypeStruct((m, cp), jnp.float32),
                   jax.ShapeDtypeStruct((nm * 8, cp), jnp.float32)),
        grid=(nm, nk),
        in_specs=[pl.BlockSpec((tm, tk), lambda i, k: (i, k)),
                  pl.BlockSpec((tk, cp), lambda i, k: (k, 0))],
        out_specs=(pl.BlockSpec((tm, cp), lambda i, k: (i, 0)),
                   pl.BlockSpec((8, cp), lambda i, k: (i, 0))),
        compiler_params=pltpu.CompilerParams(
            dimension_semantics=("parallel", "arbitrary")),
    )(a, bmat)
    return y, jnp.sum(stats.reshape(nm, 8, cp)[:, :2, :], axis=0)


def bn_relu(y, scale, shift, tm_max=1024):
    m, c = y.shape
    tm = min(tm_max, _round_up(m, 8))
    return pl.pallas_call(
        _bn_relu_kernel,
        out_shape=jax.ShapeDtypeStruct((m, c), jnp.float32),
        grid=(pl.cdiv(m, tm),),
        in_specs=[pl.BlockSpec((tm, c), lambda i: (i, 0)),
                  pl.BlockSpec((1, c), lambda i: (0, 0)),
                  pl.BlockSpec((1, c), lambda i: (0, 0))],
        out_specs=pl.BlockSpec((tm, c), lambda i: (i, 0)),
        compiler_params=pltpu.CompilerParams(dimension_semantics=("parallel",)),
    )(y, scale, shift)


def add_bn_relu(y, s, sh, z, zs, zsh, tm_max=1024):
    m, c = y.shape
    tm = min(tm_max, _round_up(m, 8))
    return pl.pallas_call(
        _add_bn_relu_kernel,
        out_shape=jax.ShapeDtypeStruct((m, c), jnp.float32),
        grid=(pl.cdiv(m, tm),),
        in_specs=[pl.BlockSpec((tm, c), lambda i: (i, 0)),
                  pl.BlockSpec((1, c), lambda i: (0, 0)),
                  pl.BlockSpec((1, c), lambda i: (0, 0)),
                  pl.BlockSpec((tm, c), lambda i: (i, 0)),
                  pl.BlockSpec((1, c), lambda i: (0, 0)),
                  pl.BlockSpec((1, c), lambda i: (0, 0))],
        out_specs=pl.BlockSpec((tm, c), lambda i: (i, 0)),
        compiler_params=pltpu.CompilerParams(dimension_semantics=("parallel",)),
    )(y, s, sh, z, zs, zsh)


# ------------------------------- glue (JAX) -----------------------------------

def im2col_3d(x, k, stride, padding, extra_k=0):
    """x: [N, D, H, W, C] -> patches [N*Do*Ho*Wo, k^3*C + extra_k]; trailing zero
    columns make K lane-aligned without a separate pad copy."""
    n, d, h, w, c = x.shape
    do = (d + 2 * padding - k) // stride + 1
    ho = (h + 2 * padding - k) // stride + 1
    wo = (w + 2 * padding - k) // stride + 1
    xp = jnp.pad(x, ((0, 0), (padding, padding), (padding, padding),
                     (padding, padding), (0, 0)))
    cols = []
    for kd in range(k):
        for kh in range(k):
            for kw in range(k):
                cols.append(xp[:, kd:kd + stride * do:stride,
                               kh:kh + stride * ho:stride,
                               kw:kw + stride * wo:stride, :])
    if extra_k:
        cols.append(jnp.zeros((n, do, ho, wo, extra_k), x.dtype))
    patches = jnp.concatenate(cols, axis=-1)
    return patches.reshape(n * do * ho * wo, k * k * k * c + extra_k), (n, do, ho, wo)


def _w_to_mat(w, k_pad, c_pad):
    # PyTorch Conv3d weight [Cout, Cin, kD, kH, kW] -> bf16 [k_pad, c_pad]
    co, ci, kd, kh, kw = w.shape
    wm = jnp.transpose(w, (2, 3, 4, 1, 0)).reshape(kd * kh * kw * ci, co)
    wm = jnp.pad(wm, ((0, k_pad - kd * kh * kw * ci), (0, c_pad - co)))
    return wm.astype(jnp.bfloat16)


def _bn_fold(stats, gamma, beta, m, c_pad):
    """Training-mode BN folded to per-channel scale/shift.  Conv bias is omitted in
    the kernel path: it is absorbed exactly by the mean subtraction."""
    c = gamma.shape[0]
    mean = stats[0] / m
    var = jnp.maximum(stats[1] / m - mean * mean, 0.0)  # clamp one-pass variance
    g = jnp.pad(gamma, (0, c_pad - c), constant_values=1.0)
    b = jnp.pad(beta, (0, c_pad - c))
    scale = g / jnp.sqrt(var + EPS)
    shift = b - mean * scale
    return scale.reshape(1, c_pad), shift.reshape(1, c_pad)


def _conv_bn(x_bf, w, gamma, beta, ksize, stride, padding, c_pad):
    """im2col conv (bf16 GEMM, f32 accumulate) + training-mode BN fold."""
    cin = x_bf.shape[-1]
    K = ksize ** 3 * cin
    tk = min(_round_up(K, 128), 512)
    k_pad = _round_up(K, tk)
    a, dims = im2col_3d(x_bf, ksize, stride, padding, extra_k=k_pad - K)
    y, stats = conv_gemm_with_stats(a, _w_to_mat(w, k_pad, c_pad))
    scale, shift = _bn_fold(stats, gamma, beta, a.shape[0], c_pad)
    return y, scale, shift, dims


def resblock_forward(x_ncdhw, p, kernel_size, downsample):
    x = jnp.transpose(x_ncdhw, (0, 2, 3, 4, 1)).astype(jnp.float32)  # NDHWC
    x_bf = x.astype(jnp.bfloat16)
    pad = kernel_size // 2
    stride1 = 2 if downsample else 1
    cout = p["w1"].shape[0]
    c_pad = _round_up(cout, 128)            # lane-dense channel dimension

    # conv1 -> bn1 -> relu
    y1, s1, sh1, (n, do, ho, wo) = _conv_bn(
        x_bf, p["w1"], p["gamma1"], p["beta1"], kernel_size, stride1, pad, c_pad)
    r1 = bn_relu(y1, s1, sh1)
    r1 = r1[:, :cout].reshape(n, do, ho, wo, cout).astype(jnp.bfloat16)

    # conv2 -> bn2
    y2, s2, sh2, _ = _conv_bn(
        r1, p["w2"], p["gamma2"], p["beta2"], kernel_size, 1, pad, c_pad)

    # shortcut
    if downsample:
        z, zs, zsh, _ = _conv_bn(
            x_bf, p["wd"], p["gammad"], p["betad"], 1, 2, 0, c_pad)
    else:
        cin = x.shape[-1]
        if cin != cout:
            raise ValueError("identity shortcut requires in_channels == out_channels")
        z = jnp.pad(x.reshape(-1, cin), ((0, 0), (0, c_pad - cin)))
        zs = jnp.ones((1, c_pad), jnp.float32)
        zsh = jnp.zeros((1, c_pad), jnp.float32)

    out = add_bn_relu(y2, s2, sh2, z, zs, zsh)[:, :cout]
    out = out.reshape(n, do, ho, wo, cout)
    return jnp.transpose(out, (0, 4, 1, 2, 3))  # back to NCDHW


# --------------------------- reference (plain JAX) -----------------------------

def ref_forward(x, p, k, downsample):
    pad = k // 2

    def conv(xi, w, b, stride, padding):
        out = jax.lax.conv_general_dilated(
            xi, w, (stride,) * 3, [(padding, padding)] * 3,
            dimension_numbers=("NCDHW", "OIDHW", "NCDHW"),
            precision=jax.lax.Precision.HIGHEST)
        return out + b.reshape(1, -1, 1, 1, 1)

    def bn(y, gamma, beta):
        mean = jnp.mean(y, axis=(0, 2, 3, 4), keepdims=True)
        var = jnp.var(y, axis=(0, 2, 3, 4), keepdims=True)
        return (gamma.reshape(1, -1, 1, 1, 1) * (y - mean) / jnp.sqrt(var + EPS)
                + beta.reshape(1, -1, 1, 1, 1))

    stride1 = 2 if downsample else 1
    r = jnp.maximum(bn(conv(x, p["w1"], p["b1"], stride1, pad),
                       p["gamma1"], p["beta1"]), 0.0)
    r = bn(conv(r, p["w2"], p["b2"], 1, pad), p["gamma2"], p["beta2"])
    sc = x
    if downsample:
        sc = bn(conv(x, p["wd"], p["bd"], 2, 0), p["gammad"], p["betad"])
    return jnp.maximum(sc + r, 0.0)


# --------------------------------- params --------------------------------------

def init_params(key, cin, cout, k, downsample):
    keys = jax.random.split(key, 14)
    p = {
        "w1": 0.1 * jax.random.normal(keys[0], (cout, cin, k, k, k), jnp.float32),
        "b1": 0.1 * jax.random.normal(keys[1], (cout,), jnp.float32),
        "gamma1": 1.0 + 0.1 * jax.random.normal(keys[2], (cout,), jnp.float32),
        "beta1": 0.1 * jax.random.normal(keys[3], (cout,), jnp.float32),
        "w2": 0.1 * jax.random.normal(keys[4], (cout, cout, k, k, k), jnp.float32),
        "b2": 0.1 * jax.random.normal(keys[5], (cout,), jnp.float32),
        "gamma2": 1.0 + 0.1 * jax.random.normal(keys[6], (cout,), jnp.float32),
        "beta2": 0.1 * jax.random.normal(keys[7], (cout,), jnp.float32),
    }
    if downsample:
        p.update({
            "wd": 0.1 * jax.random.normal(keys[8], (cout, cin, 1, 1, 1), jnp.float32),
            "bd": 0.1 * jax.random.normal(keys[9], (cout,), jnp.float32),
            "gammad": 1.0 + 0.1 * jax.random.normal(keys[10], (cout,), jnp.float32),
            "betad": 0.1 * jax.random.normal(keys[11], (cout,), jnp.float32),
        })
    return p


if __name__ == "__main__":
    root = jax.random.PRNGKey(0)
    fwd = jax.jit(resblock_forward, static_argnums=(2, 3))

    # (cin, cout, downsample): exercise both the strided-conv and identity shortcuts.
    for idx, (CIN, COUT, DOWNSAMPLE) in enumerate([(4, 8, True), (8, 8, False)]):
        kx, kp = jax.random.split(jax.random.fold_in(root, idx))
        N, D, K = 2, 8, 3
        x = jax.random.normal(kx, (N, CIN, D, D, D), jnp.float32)
        params = init_params(kp, CIN, COUT, K, DOWNSAMPLE)

        out = jax.block_until_ready(fwd(x, params, K, DOWNSAMPLE))
        ref = ref_forward(x, params, K, DOWNSAMPLE)

        assert out.shape == ref.shape, (out.shape, ref.shape)
        rel_err = jnp.linalg.norm(out - ref) / (jnp.linalg.norm(ref) + 1e-6)
        assert bool(jnp.isfinite(out).all())
        # MXU inputs are bf16 (f32 accumulate); allow bf16-level tolerance.
        assert bool(rel_err < 2e-2), f"relative error too large: {rel_err}"

    print("KERNEL_OK")
</pallas_src>

<mosaic_0001>
module attributes {stable_mosaic.version = 11 : i64} {
  func.func @_gemm_bn_stats_kernel(%arg0: i32, %arg1: i32, %arg2: memref<128x128xbf16, #tpu.memory_space<vmem>>, %arg3: memref<128x128xbf16, #tpu.memory_space<vmem>>, %arg4: memref<128x128xf32, #tpu.memory_space<vmem>>, %arg5: memref<8x128xf32, #tpu.memory_space<vmem>>) attributes {dimension_semantics = [#tpu.dimension_semantics<parallel>, #tpu.dimension_semantics<arbitrary>], iteration_bounds = array<i64: 1, 1>, scalar_prefetch = 0 : i64, scratch_operands = 0 : i64, tpu.core_type = #tpu.core_type<tc>, window_params = [{transform_indices = @transform_0, window_bounds = array<i64: 128, 128>}, {transform_indices = @transform_1, window_bounds = array<i64: 128, 128>}, {transform_indices = @transform_2, window_bounds = array<i64: 128, 128>}, {transform_indices = @transform_3, window_bounds = array<i64: 8, 128>}]} {
    %c0_i32 = arith.constant 0 : i32
    %0 = arith.cmpi eq, %arg1, %c0_i32 : i32
    %1 = arith.extui %0 : i1 to i32
    %c0_i32_0 = arith.constant 0 : i32
    %2 = arith.cmpi ne, %1, %c0_i32_0 : i32
    scf.if %2 {
      %cst_10 = arith.constant 0.000000e+00 : f32
      %12 = vector.broadcast %cst_10 : f32 to vector<128x128xf32>
      %c0_11 = arith.constant 0 : index
      %c0_12 = arith.constant 0 : index
      %13 = vector.load %arg4[%c0_11, %c0_12] : memref<128x128xf32, #tpu.memory_space<vmem>>, vector<128x128xf32>
      tpu.vector_store %arg4[%c0_11, %c0_12], %12 {strides = array<i32>} : memref<128x128xf32, #tpu.memory_space<vmem>>, vector<128x128xf32>,
    } else {
    }
    %c0 = arith.constant 0 : index
    %c0_1 = arith.constant 0 : index
    %3 = vector.load %arg4[%c0, %c0_1] : memref<128x128xf32, #tpu.memory_space<vmem>>, vector<128x128xf32>
    %c0_2 = arith.constant 0 : index
    %c0_3 = arith.constant 0 : index
    %4 = vector.load %arg2[%c0_2, %c0_3] : memref<128x128xbf16, #tpu.memory_space<vmem>>, vector<128x128xbf16>
    %c0_4 = arith.constant 0 : index
    %c0_5 = arith.constant 0 : index
    %5 = vector.load %arg3[%c0_4, %c0_5] : memref<128x128xbf16, #tpu.memory_space<vmem>>, vector<128x128xbf16>
    %cst = arith.constant dense<0.000000e+00> : vector<128x128xf32>
    %6 = tpu.matmul %4, %5, %cst {dimension_numbers = #tpu.dot_dimension_numbers<[1], [0], [0], [1], [0, 0, 1, 1], [], []>} : vector<128x128xbf16>, vector<128x128xbf16>, vector<128x128xf32> -> vector<128x128xf32>
    %7 = arith.addf %3, %6 : vector<128x128xf32>
    %c0_6 = arith.constant 0 : index
    %c0_7 = arith.constant 0 : index
    %8 = vector.load %arg4[%c0_6, %c0_7] : memref<128x128xf32, #tpu.memory_space<vmem>>, vector<128x128xf32>
    tpu.vector_store %arg4[%c0_6, %c0_7], %7 {strides = array<i32>} : memref<128x128xf32, #tpu.memory_space<vmem>>, vector<128x128xf32>,
    %c0_i32_8 = arith.constant 0 : i32
    %9 = arith.cmpi eq, %arg1, %c0_i32_8 : i32
    %10 = arith.extui %9 : i1 to i32
    %c0_i32_9 = arith.constant 0 : i32
    %11 = arith.cmpi ne, %10, %c0_i32_9 : i32
    scf.if %11 {
      %c0_10 = arith.constant 0 : index
      %c0_11 = arith.constant 0 : index
      %12 = vector.load %arg4[%c0_10, %c0_11] : memref<128x128xf32, #tpu.memory_space<vmem>>, vector<128x128xf32>
      %cst_12 = arith.constant dense<0.000000e+00> : vector<128xf32>
      %13 = vector.multi_reduction <add>, %12, %cst_12 [0] : vector<128x128xf32> to vector<128xf32>
      %14 = vector.shape_cast %13 : vector<128xf32> to vector<1x128xf32>
      %15 = arith.mulf %12, %12 : vector<128x128xf32>
      %cst_13 = arith.constant dense<0.000000e+00> : vector<128xf32>
      %16 = vector.multi_reduction <add>, %15, %cst_13 [0] : vector<128x128xf32> to vector<128xf32>
      %17 = vector.shape_cast %16 : vector<128xf32> to vector<1x128xf32>
      %18 = tpu.iota {dimensions = array<i32: 0>} : vector<8x128xi32>
      %c0_i32_14 = arith.constant 0 : i32
      %19 = vector.broadcast %c0_i32_14 : i32 to vector<8x128xi32>
      %20 = arith.cmpi eq, %18, %19 : vector<8x128xi32>
      %c1_i32 = arith.constant 1 : i32
      %21 = vector.broadcast %c1_i32 : i32 to vector<8x128xi32>
      %22 = arith.cmpi eq, %18, %21 : vector<8x128xi32>
      %cst_15 = arith.constant 0.000000e+00 : f32
      %23 = vector.shape_cast %17 : vector<1x128xf32> to vector<1x128xf32>
      %24 = vector.broadcast %23 : vector<1x128xf32> to vector<8x128xf32>
      %25 = vector.broadcast %cst_15 : f32 to vector<8x128xf32>
      %26 = arith.select %22, %24, %25 : vector<8x128xi1>, vector<8x128xf32>
      %27 = vector.shape_cast %14 : vector<1x128xf32> to vector<1x128xf32>
      %28 = vector.broadcast %27 : vector<1x128xf32> to vector<8x128xf32>
      %29 = arith.select %20, %28, %26 : vector<8x128xi1>, vector<8x128xf32>
      %c0_16 = arith.constant 0 : index
      %c0_17 = arith.constant 0 : index
      %30 = vector.load %arg5[%c0_16, %c0_17] : memref<8x128xf32, #tpu.memory_space<vmem>>, vector<8x128xf32>
      tpu.vector_store %arg5[%c0_16, %c0_17], %29 {strides = array<i32>} : memref<8x128xf32, #tpu.memory_space<vmem>>, vector<8x128xf32>,
    } else {
    }
    return
  }
  func.func @transform_0(%arg0: i32, %arg1: i32) -> (i32, i32) {
    %c0_i32 = arith.constant 0 : i32
    return %arg0, %arg1 : i32, i32
  }
  func.func @transform_1(%arg0: i32, %arg1: i32) -> (i32, i32) {
    %c0_i32 = arith.constant 0 : i32
    %c0_i32_0 = arith.constant 0 : i32
    return %arg1, %c0_i32 : i32, i32
  }
  func.func @transform_2(%arg0: i32, %arg1: i32) -> (i32, i32) {
    %c0_i32 = arith.constant 0 : i32
    %c0_i32_0 = arith.constant 0 : i32
    return %arg0, %c0_i32 : i32, i32
  }
  func.func @transform_3(%arg0: i32, %arg1: i32) -> (i32, i32) {
    %c0_i32 = arith.constant 0 : i32
    %c0_i32_0 = arith.constant 0 : i32
    return %arg0, %c0_i32 : i32, i32
  }
}

module attributes {stable_mosaic.version = 11 : i64} {
  func.func @_bn_relu_kernel(%arg0: i32, %arg1: memref<128x128xf32, #tpu.memory_space<vmem>>, %arg2: memref<1x128xf32, #tpu.memory_space<vmem>>, %arg3: memref<1x128xf32, #tpu.memory_space<vmem>>, %arg4: memref<128x128xf32, #tpu.memory_space<vmem>>) attributes {dimension_semantics = [#tpu.dimension_semantics<parallel>], iteration_bounds = array<i64: 1>, scalar_prefetch = 0 : i64, scratch_operands = 0 : i64, tpu.core_type = #tpu.core_type<tc>, window_params = [{transform_indices = @transform_0, window_bounds = array<i64: 128, 128>}, {pipeline_mode = #tpu.pipeline_mode<synchronous>, transform_indices = @transform_1, window_bounds = array<i64: 1, 128>}, {pipeline_mode = #tpu.pipeline_mode<synchronous>, transform_indices = @transform_2, window_bounds = array<i64: 1, 128>}, {transform_indices = @transform_3, window_bounds = array<i64: 128, 128>}]} {
    %c0 = arith.constant 0 : index
    %c0_0 = arith.constant 0 : index
    %0 = vector.load %arg1[%c0, %c0_0] : memref<128x128xf32, #tpu.memory_space<vmem>>, vector<128x128xf32>
    %c0_1 = arith.constant 0 : index
    %c0_2 = arith.constant 0 : index
    %1 = vector.load %arg2[%c0_1, %c0_2] : memref<1x128xf32, #tpu.memory_space<vmem>>, vector<1x128xf32>
    %2 = vector.broadcast %1 : vector<1x128xf32> to vector<128x128xf32>
    %3 = arith.mulf %0, %2 : vector<128x128xf32>
    %c0_3 = arith.constant 0 : index
    %c0_4 = arith.constant 0 : index
    %4 = vector.load %arg3[%c0_3, %c0_4] : memref<1x128xf32, #tpu.memory_space<vmem>>, vector<1x128xf32>
    %5 = vector.broadcast %4 : vector<1x128xf32> to vector<128x128xf32>
    %6 = arith.addf %3, %5 : vector<128x128xf32>
    %cst = arith.constant 0.000000e+00 : f32
    %7 = vector.broadcast %cst : f32 to vector<128x128xf32>
    %8 = arith.maximumf %6, %7 : vector<128x128xf32>
    %c0_5 = arith.constant 0 : index
    %c0_6 = arith.constant 0 : index
    %9 = vector.load %arg4[%c0_5, %c0_6] : memref<128x128xf32, #tpu.memory_space<vmem>>, vector<128x128xf32>
    tpu.vector_store %arg4[%c0_5, %c0_6], %8 {strides = array<i32>} : memref<128x128xf32, #tpu.memory_space<vmem>>, vector<128x128xf32>,
    return
  }
  func.func @transform_0(%arg0: i32) -> (i32, i32) {
    %c0_i32 = arith.constant 0 : i32
    %c0_i32_0 = arith.constant 0 : i32
    return %arg0, %c0_i32 : i32, i32
  }
  func.func @transform_1(%arg0: i32) -> (i32, i32) {
    %c0_i32 = arith.constant 0 : i32
    %c0_i32_0 = arith.constant 0 : i32
    %c0_i32_1 = arith.constant 0 : i32
    return %c0_i32, %c0_i32_0 : i32, i32
  }
  func.func @transform_2(%arg0: i32) -> (i32, i32) {
    %c0_i32 = arith.constant 0 : i32
    %c0_i32_0 = arith.constant 0 : i32
    %c0_i32_1 = arith.constant 0 : i32
    return %c0_i32, %c0_i32_0 : i32, i32
  }
  func.func @transform_3(%arg0: i32) -> (i32, i32) {
    %c0_i32 = arith.constant 0 : i32
    %c0_i32_0 = arith.constant 0 : i32
    return %arg0, %c0_i32 : i32, i32
  }
}

module attributes {stable_mosaic.version = 11 : i64} {
  func.func @_gemm_bn_stats_kernel(%arg0: i32, %arg1: i32, %arg2: memref<128x256xbf16, #tpu.memory_space<vmem>>, %arg3: memref<256x128xbf16, #tpu.memory_space<vmem>>, %arg4: memref<128x128xf32, #tpu.memory_space<vmem>>, %arg5: memref<8x128xf32, #tpu.memory_space<vmem>>) attributes {dimension_semantics = [#tpu.dimension_semantics<parallel>, #tpu.dimension_semantics<arbitrary>], iteration_bounds = array<i64: 1, 1>, scalar_prefetch = 0 : i64, scratch_operands = 0 : i64, tpu.core_type = #tpu.core_type<tc>, window_params = [{transform_indices = @transform_0, window_bounds = array<i64: 128, 256>}, {transform_indices = @transform_1, window_bounds = array<i64: 256, 128>}, {transform_indices = @transform_2, window_bounds = array<i64: 128, 128>}, {transform_indices = @transform_3, window_bounds = array<i64: 8, 128>}]} {
    %c0_i32 = arith.constant 0 : i32
    %0 = arith.cmpi eq, %arg1, %c0_i32 : i32
    %1 = arith.extui %0 : i1 to i32
    %c0_i32_0 = arith.constant 0 : i32
    %2 = arith.cmpi ne, %1, %c0_i32_0 : i32
    scf.if %2 {
      %cst_10 = arith.constant 0.000000e+00 : f32
      %12 = vector.broadcast %cst_10 : f32 to vector<128x128xf32>
      %c0_11 = arith.constant 0 : index
      %c0_12 = arith.constant 0 : index
      %13 = vector.load %arg4[%c0_11, %c0_12] : memref<128x128xf32, #tpu.memory_space<vmem>>, vector<128x128xf32>
      tpu.vector_store %arg4[%c0_11, %c0_12], %12 {strides = array<i32>} : memref<128x128xf32, #tpu.memory_space<vmem>>, vector<128x128xf32>,
    } else {
    }
    %c0 = arith.constant 0 : index
    %c0_1 = arith.constant 0 : index
    %3 = vector.load %arg4[%c0, %c0_1] : memref<128x128xf32, #tpu.memory_space<vmem>>, vector<128x128xf32>
    %c0_2 = arith.constant 0 : index
    %c0_3 = arith.constant 0 : index
    %4 = vector.load %arg2[%c0_2, %c0_3] : memref<128x256xbf16, #tpu.memory_space<vmem>>, vector<128x256xbf16>
    %c0_4 = arith.constant 0 : index
    %c0_5 = arith.constant 0 : index
    %5 = vector.load %arg3[%c0_4, %c0_5] : memref<256x128xbf16, #tpu.memory_space<vmem>>, vector<256x128xbf16>
    %cst = arith.constant dense<0.000000e+00> : vector<128x128xf32>
    %6 = tpu.matmul %4, %5, %cst {dimension_numbers = #tpu.dot_dimension_numbers<[1], [0], [0], [1], [0, 0, 1, 1], [], []>} : vector<128x256xbf16>, vector<256x128xbf16>, vector<128x128xf32> -> vector<128x128xf32>
    %7 = arith.addf %3, %6 : vector<128x128xf32>
    %c0_6 = arith.constant 0 : index
    %c0_7 = arith.constant 0 : index
    %8 = vector.load %arg4[%c0_6, %c0_7] : memref<128x128xf32, #tpu.memory_space<vmem>>, vector<128x128xf32>
    tpu.vector_store %arg4[%c0_6, %c0_7], %7 {strides = array<i32>} : memref<128x128xf32, #tpu.memory_space<vmem>>, vector<128x128xf32>,
    %c0_i32_8 = arith.constant 0 : i32
    %9 = arith.cmpi eq, %arg1, %c0_i32_8 : i32
    %10 = arith.extui %9 : i1 to i32
    %c0_i32_9 = arith.constant 0 : i32
    %11 = arith.cmpi ne, %10, %c0_i32_9 : i32
    scf.if %11 {
      %c0_10 = arith.constant 0 : index
      %c0_11 = arith.constant 0 : index
      %12 = vector.load %arg4[%c0_10, %c0_11] : memref<128x128xf32, #tpu.memory_space<vmem>>, vector<128x128xf32>
      %cst_12 = arith.constant dense<0.000000e+00> : vector<128xf32>
      %13 = vector.multi_reduction <add>, %12, %cst_12 [0] : vector<128x128xf32> to vector<128xf32>
      %14 = vector.shape_cast %13 : vector<128xf32> to vector<1x128xf32>
      %15 = arith.mulf %12, %12 : vector<128x128xf32>
      %cst_13 = arith.constant dense<0.000000e+00> : vector<128xf32>
      %16 = vector.multi_reduction <add>, %15, %cst_13 [0] : vector<128x128xf32> to vector<128xf32>
      %17 = vector.shape_cast %16 : vector<128xf32> to vector<1x128xf32>
      %18 = tpu.iota {dimensions = array<i32: 0>} : vector<8x128xi32>
      %c0_i32_14 = arith.constant 0 : i32
      %19 = vector.broadcast %c0_i32_14 : i32 to vector<8x128xi32>
      %20 = arith.cmpi eq, %18, %19 : vector<8x128xi32>
      %c1_i32 = arith.constant 1 : i32
      %21 = vector.broadcast %c1_i32 : i32 to vector<8x128xi32>
      %22 = arith.cmpi eq, %18, %21 : vector<8x128xi32>
      %cst_15 = arith.constant 0.000000e+00 : f32
      %23 = vector.shape_cast %17 : vector<1x128xf32> to vector<1x128xf32>
      %24 = vector.broadcast %23 : vector<1x128xf32> to vector<8x128xf32>
      %25 = vector.broadcast %cst_15 : f32 to vector<8x128xf32>
      %26 = arith.select %22, %24, %25 : vector<8x128xi1>, vector<8x128xf32>
      %27 = vector.shape_cast %14 : vector<1x128xf32> to vector<1x128xf32>
      %28 = vector.broadcast %27 : vector<1x128xf32> to vector<8x128xf32>
      %29 = arith.select %20, %28, %26 : vector<8x128xi1>, vector<8x128xf32>
      %c0_16 = arith.constant 0 : index
      %c0_17 = arith.constant 0 : index
      %30 = vector.load %arg5[%c0_16, %c0_17] : memref<8x128xf32, #tpu.memory_space<vmem>>, vector<8x128xf32>
      tpu.vector_store %arg5[%c0_16, %c0_17], %29 {strides = array<i32>} : memref<8x128xf32, #tpu.memory_space<vmem>>, vector<8x128xf32>,
    } else {
    }
    return
  }
  func.func @transform_0(%arg0: i32, %arg1: i32) -> (i32, i32) {
    %c0_i32 = arith.constant 0 : i32
    return %arg0, %arg1 : i32, i32
  }
  func.func @transform_1(%arg0: i32, %arg1: i32) -> (i32, i32) {
    %c0_i32 = arith.constant 0 : i32
    %c0_i32_0 = arith.constant 0 : i32
    return %arg1, %c0_i32 : i32, i32
  }
  func.func @transform_2(%arg0: i32, %arg1: i32) -> (i32, i32) {
    %c0_i32 = arith.constant 0 : i32
    %c0_i32_0 = arith.constant 0 : i32
    return %arg0, %c0_i32 : i32, i32
  }
  func.func @transform_3(%arg0: i32, %arg1: i32) -> (i32, i32) {
    %c0_i32 = arith.constant 0 : i32
    %c0_i32_0 = arith.constant 0 : i32
    return %arg0, %c0_i32 : i32, i32
  }
}

module attributes {stable_mosaic.version = 11 : i64} {
  func.func @_add_bn_relu_kernel(%arg0: i32, %arg1: memref<128x128xf32, #tpu.memory_space<vmem>>, %arg2: memref<1x128xf32, #tpu.memory_space<vmem>>, %arg3: memref<1x128xf32, #tpu.memory_space<vmem>>, %arg4: memref<128x128xf32, #tpu.memory_space<vmem>>, %arg5: memref<1x128xf32, #tpu.memory_space<vmem>>, %arg6: memref<1x128xf32, #tpu.memory_space<vmem>>, %arg7: memref<128x128xf32, #tpu.memory_space<vmem>>) attributes {dimension_semantics = [#tpu.dimension_semantics<parallel>], iteration_bounds = array<i64: 1>, scalar_prefetch = 0 : i64, scratch_operands = 0 : i64, tpu.core_type = #tpu.core_type<tc>, window_params = [{transform_indices = @transform_0, window_bounds = array<i64: 128, 128>}, {pipeline_mode = #tpu.pipeline_mode<synchronous>, transform_indices = @transform_1, window_bounds = array<i64: 1, 128>}, {pipeline_mode = #tpu.pipeline_mode<synchronous>, transform_indices = @transform_2, window_bounds = array<i64: 1, 128>}, {transform_indices = @transform_3, window_bounds = array<i64: 128, 128>}, {pipeline_mode = #tpu.pipeline_mode<synchronous>, transform_indices = @transform_4, window_bounds = array<i64: 1, 128>}, {pipeline_mode = #tpu.pipeline_mode<synchronous>, transform_indices = @transform_5, window_bounds = array<i64: 1, 128>}, {transform_indices = @transform_6, window_bounds = array<i64: 128, 128>}]} {
    %c0 = arith.constant 0 : index
    %c0_0 = arith.constant 0 : index
    %0 = vector.load %arg1[%c0, %c0_0] : memref<128x128xf32, #tpu.memory_space<vmem>>, vector<128x128xf32>
    %c0_1 = arith.constant 0 : index
    %c0_2 = arith.constant 0 : index
    %1 = vector.load %arg2[%c0_1, %c0_2] : memref<1x128xf32, #tpu.memory_space<vmem>>, vector<1x128xf32>
    %2 = vector.broadcast %1 : vector<1x128xf32> to vector<128x128xf32>
    %3 = arith.mulf %0, %2 : vector<128x128xf32>
    %c0_3 = arith.constant 0 : index
    %c0_4 = arith.constant 0 : index
    %4 = vector.load %arg3[%c0_3, %c0_4] : memref<1x128xf32, #tpu.memory_space<vmem>>, vector<1x128xf32>
    %5 = vector.broadcast %4 : vector<1x128xf32> to vector<128x128xf32>
    %6 = arith.addf %3, %5 : vector<128x128xf32>
    %c0_5 = arith.constant 0 : index
    %c0_6 = arith.constant 0 : index
    %7 = vector.load %arg4[%c0_5, %c0_6] : memref<128x128xf32, #tpu.memory_space<vmem>>, vector<128x128xf32>
    %c0_7 = arith.constant 0 : index
    %c0_8 = arith.constant 0 : index
    %8 = vector.load %arg5[%c0_7, %c0_8] : memref<1x128xf32, #tpu.memory_space<vmem>>, vector<1x128xf32>
    %9 = vector.broadcast %8 : vector<1x128xf32> to vector<128x128xf32>
    %10 = arith.mulf %7, %9 : vector<128x128xf32>
    %11 = arith.addf %6, %10 : vector<128x128xf32>
    %c0_9 = arith.constant 0 : index
    %c0_10 = arith.constant 0 : index
    %12 = vector.load %arg6[%c0_9, %c0_10] : memref<1x128xf32, #tpu.memory_space<vmem>>, vector<1x128xf32>
    %13 = vector.broadcast %12 : vector<1x128xf32> to vector<128x128xf32>
    %14 = arith.addf %11, %13 : vector<128x128xf32>
    %cst = arith.constant 0.000000e+00 : f32
    %15 = vector.broadcast %cst : f32 to vector<128x128xf32>
    %16 = arith.maximumf %14, %15 : vector<128x128xf32>
    %c0_11 = arith.constant 0 : index
    %c0_12 = arith.constant 0 : index
    %17 = vector.load %arg7[%c0_11, %c0_12] : memref<128x128xf32, #tpu.memory_space<vmem>>, vector<128x128xf32>
    tpu.vector_store %arg7[%c0_11, %c0_12], %16 {strides = array<i32>} : memref<128x128xf32, #tpu.memory_space<vmem>>, vector<128x128xf32>,
    return
  }
  func.func @transform_0(%arg0: i32) -> (i32, i32) {
    %c0_i32 = arith.constant 0 : i32
    %c0_i32_0 = arith.constant 0 : i32
    return %arg0, %c0_i32 : i32, i32
  }
  func.func @transform_1(%arg0: i32) -> (i32, i32) {
    %c0_i32 = arith.constant 0 : i32
    %c0_i32_0 = arith.constant 0 : i32
    %c0_i32_1 = arith.constant 0 : i32
    return %c0_i32, %c0_i32_0 : i32, i32
  }
  func.func @transform_2(%arg0: i32) -> (i32, i32) {
    %c0_i32 = arith.constant 0 : i32
    %c0_i32_0 = arith.constant 0 : i32
    %c0_i32_1 = arith.constant 0 : i32
    return %c0_i32, %c0_i32_0 : i32, i32
  }
  func.func @transform_3(%arg0: i32) -> (i32, i32) {
    %c0_i32 = arith.constant 0 : i32
    %c0_i32_0 = arith.constant 0 : i32
    return %arg0, %c0_i32 : i32, i32
  }
  func.func @transform_4(%arg0: i32) -> (i32, i32) {
    %c0_i32 = arith.constant 0 : i32
    %c0_i32_0 = arith.constant 0 : i32
    %c0_i32_1 = arith.constant 0 : i32
    return %c0_i32, %c0_i32_0 : i32, i32
  }
  func.func @transform_5(%arg0: i32) -> (i32, i32) {
    %c0_i32 = arith.constant 0 : i32
    %c0_i32_0 = arith.constant 0 : i32
    %c0_i32_1 = arith.constant 0 : i32
    return %c0_i32, %c0_i32_0 : i32, i32
  }
  func.func @transform_6(%arg0: i32) -> (i32, i32) {
    %c0_i32 = arith.constant 0 : i32
    %c0_i32_0 = arith.constant 0 : i32
    return %arg0, %c0_i32 : i32, i32
  }
}

</mosaic_0001>

<llo_original>
// kernel: resblock_forward.6
$region0: #{resblock_forward.6}
  #allocation0 [shape = 'u32[]', space=smem, size = 0x4, offset = 0x4, fixed_abs, tag = 'smem constant byte address 0x4 - core index']
  #allocation1 [shape = 'u32[144,128]{1,0:T(1,128)}', space=vmem, size = 0x12000, scoped, tag = 'internal scratch']
  %s0 = inlined_call_operand.vmem [shape: f32[128,128], index: 0, kind: input, shape index: {}]
  %s1 = inlined_call_operand.vmem [shape: f32[1,128], index: 1, kind: input, shape index: {}]
  %s2 = inlined_call_operand.vmem [shape: f32[1,128], index: 2, kind: input, shape index: {}]
  %s3 = inlined_call_operand.vmem [shape: f32[128,128], index: 3, kind: output, shape index: {}]
  %s4 = sld [smem:[#allocation0]]
  $region22: #{resblock_forward.6} parent=0
    _
  %s6 = ssub.s32 1, %s4
  %s7 = scalar_select 0, %s6, %s4
  // Predicated region
  $region2: #{resblock_forward.6} parent=0 // pred_check
    _
  $region3: #{resblock_forward.6} parent=0 // pred_check_branch
    %9 = sbr.rel (0) target = $region5
  $region4: #{resblock_forward.6} parent=0 // pred_region
    _
  $region5: #{resblock_forward.6} parent=0 // pred_fallthru
    _
  // Predicated region
  $region6: #{resblock_forward.6} parent=0 // pred_check
    _
  $region7: #{resblock_forward.6} parent=0 // pred_check_branch
    %11 = sbr.rel (0) target = $region9
  $region8: #{resblock_forward.6} parent=0 // pred_region
    _
  $region9: #{resblock_forward.6} parent=0 // pred_fallthru
    _
  // Predicated region
  $region10: #{resblock_forward.6} parent=0 // pred_check
    _
  $region11: #{resblock_forward.6} parent=0 // pred_check_branch
    %13 = sbr.rel (0) target = $region13
  $region12: #{resblock_forward.6} parent=0 // pred_region
    _
  $region13: #{resblock_forward.6} parent=0 // pred_fallthru
    _
  %v14 = vld [vmem:[%s0] sm:$0xff]
  %v15 = vld [vmem:[%s0 + $0x8] sm:$0xff]
  %v16 = vld [vmem:[%s0 + $0x10] sm:$0xff]
  %v17 = vld [vmem:[%s0 + $0x18] sm:$0xff]
  %v18 = vld [vmem:[%s0 + $0x20] sm:$0xff]
  %v19 = vld [vmem:[%s0 + $0x28] sm:$0xff]
  %v20 = vld [vmem:[%s0 + $0x30] sm:$0xff]
  %v21 = vld [vmem:[%s0 + $0x38] sm:$0xff]
  %v22 = vld [vmem:[%s0 + $0x40] sm:$0xff]
  %v23 = vld [vmem:[%s0 + $0x48] sm:$0xff]
  %v24 = vld [vmem:[%s0 + $0x50] sm:$0xff]
  %v25 = vld [vmem:[%s0 + $0x58] sm:$0xff]
  %v26 = vld [vmem:[%s0 + $0x60] sm:$0xff]
  %v27 = vld [vmem:[%s0 + $0x68] sm:$0xff]
  %v28 = vld [vmem:[%s0 + $0x70] sm:$0xff]
  %v29 = vld [vmem:[%s0 + $0x78] sm:$0xff]
  %v30 = vld [vmem:[%s1] sm:$0x1]
  %v32 = vlaneseq
  %v33 = vshrl.u32 %v32, 7
  %v34 = vsub.s32 0, %v33
  %v35 = vrot.slane %v30, %v34
  %v37 = vmul.f32 %v14, %v35
  %v38 = vmul.f32 %v15, %v35
  %v39 = vmul.f32 %v16, %v35
  %v40 = vmul.f32 %v17, %v35
  %v41 = vmul.f32 %v18, %v35
  %v42 = vmul.f32 %v19, %v35
  %v43 = vmul.f32 %v20, %v35
  %v44 = vmul.f32 %v21, %v35
  %v45 = vmul.f32 %v22, %v35
  %v46 = vmul.f32 %v23, %v35
  %v47 = vmul.f32 %v24, %v35
  %v48 = vmul.f32 %v25, %v35
  %v49 = vmul.f32 %v26, %v35
  %v50 = vmul.f32 %v27, %v35
  %v51 = vmul.f32 %v28, %v35
  %v52 = vmul.f32 %v29, %v35
  %v53 = vld [vmem:[%s2] sm:$0x1]
  %v55 = vlaneseq
  %v56 = vshrl.u32 %v55, 7
  %v57 = vsub.s32 0, %v56
  %v58 = vrot.slane %v53, %v57
  %v60 = vadd.f32 %v37, %v58
  %v61 = vadd.f32 %v38, %v58
  %v62 = vadd.f32 %v39, %v58
  %v63 = vadd.f32 %v40, %v58
  %v64 = vadd.f32 %v41, %v58
  %v65 = vadd.f32 %v42, %v58
  %v66 = vadd.f32 %v43, %v58
  %v67 = vadd.f32 %v44, %v58
  %v68 = vadd.f32 %v45, %v58
  %v69 = vadd.f32 %v46, %v58
  %v70 = vadd.f32 %v47, %v58
  %v71 = vadd.f32 %v48, %v58
  %v72 = vadd.f32 %v49, %v58
  %v73 = vadd.f32 %v50, %v58
  %v74 = vadd.f32 %v51, %v58
  %v75 = vadd.f32 %v52, %v58
  %v76 = vmax.f32 %v60, 0.0
  %v77 = vmax.f32 %v61, 0.0
  %v78 = vmax.f32 %v62, 0.0
  %v79 = vmax.f32 %v63, 0.0
  %v80 = vmax.f32 %v64, 0.0
  %v81 = vmax.f32 %v65, 0.0
  %v82 = vmax.f32 %v66, 0.0
  %v83 = vmax.f32 %v67, 0.0
  %v84 = vmax.f32 %v68, 0.0
  %v85 = vmax.f32 %v69, 0.0
  %v86 = vmax.f32 %v70, 0.0
  %v87 = vmax.f32 %v71, 0.0
  %v88 = vmax.f32 %v72, 0.0
  %v89 = vmax.f32 %v73, 0.0
  %v90 = vmax.f32 %v74, 0.0
  %v91 = vmax.f32 %v75, 0.0
  %92 = vst [vmem:[%s3] sm:$0xff] %v76
  %93 = vst [vmem:[%s3 + $0x8] sm:$0xff] %v77
  %94 = vst [vmem:[%s3 + $0x10] sm:$0xff] %v78
  %95 = vst [vmem:[%s3 + $0x18] sm:$0xff] %v79
  %96 = vst [vmem:[%s3 + $0x20] sm:$0xff] %v80
  %97 = vst [vmem:[%s3 + $0x28] sm:$0xff] %v81
  %98 = vst [vmem:[%s3 + $0x30] sm:$0xff] %v82
  %99 = vst [vmem:[%s3 + $0x38] sm:$0xff] %v83
  %100 = vst [vmem:[%s3 + $0x40] sm:$0xff] %v84
  %101 = vst [vmem:[%s3 + $0x48] sm:$0xff] %v85
  %102 = vst [vmem:[%s3 + $0x50] sm:$0xff] %v86
  %103 = vst [vmem:[%s3 + $0x58] sm:$0xff] %v87
  %104 = vst [vmem:[%s3 + $0x60] sm:$0xff] %v88
  %105 = vst [vmem:[%s3 + $0x68] sm:$0xff] %v89
  %106 = vst [vmem:[%s3 + $0x70] sm:$0xff] %v90
  %107 = vst [vmem:[%s3 + $0x78] sm:$0xff] %v91
  // Predicated region
  $region14: #{resblock_forward.6} parent=0 // pred_check
    _
  $region15: #{resblock_forward.6} parent=0 // pred_check_branch
    %109 = sbr.rel (0) target = $region17
  $region16: #{resblock_forward.6} parent=0 // pred_region
    _
  $region17: #{resblock_forward.6} parent=0 // pred_fallthru
    _
  // Predicated region
  $region18: #{resblock_forward.6} parent=0 // pred_check
    _
  $region19: #{resblock_forward.6} parent=0 // pred_check_branch
    %111 = sbr.rel (0) target = $region21
  $region20: #{resblock_forward.6} parent=0 // pred_region
    _
  $region21: #{resblock_forward.6} parent=0 // pred_fallthru
    _

// kernel: resblock_forward.5
$region0: #{resblock_forward.5}
  #allocation0 [shape = 'u32[]', space=smem, size = 0x4, offset = 0x4, fixed_abs, tag = 'smem constant byte address 0x4 - core index']
  #allocation1 [shape = 'u32[144,128]{1,0:T(1,128)}', space=vmem, size = 0x12000, scoped, tag = 'internal scratch']
  %s0 = inlined_call_operand.vmem [shape: bf16[128,128], index: 0, kind: input, shape index: {}]
  %s1 = inlined_call_operand.vmem [shape: bf16[128,128], index: 1, kind: input, shape index: {}]
  %s2 = inlined_call_operand.vmem [shape: f32[128,128], index: 2, kind: output, shape index: {0}]
  %s3 = inlined_call_operand.vmem [shape: f32[8,128], index: 3, kind: output, shape index: {1}]
  %4 = xla_tuple %s2, %s3
  %s5 = sld [smem:[#allocation0]]
  $region34: #{resblock_forward.5} parent=0
    _
  %s7 = ssub.s32 1, %s5
  %s8 = scalar_select 0, %s7, %s5
  // Predicated region
  $region2: #{resblock_forward.5} parent=0 // pred_check
    _
  $region3: #{resblock_forward.5} parent=0 // pred_check_branch
    %10 = sbr.rel (0) target = $region5
  $region4: #{resblock_forward.5} parent=0 // pred_region
    _
  $region5: #{resblock_forward.5} parent=0 // pred_fallthru
    _
  // Predicated region
  $region6: #{resblock_forward.5} parent=0 // pred_check
    _
  $region7: #{resblock_forward.5} parent=0 // pred_check_branch
    %12 = sbr.rel (0) target = $region9
  $region8: #{resblock_forward.5} parent=0 // pred_region
    _
  $region9: #{resblock_forward.5} parent=0 // pred_fallthru
    _
  %p14 = scmp.eq.s32.totalorder 0, 0
  // Predicated region
  $region10: #{resblock_forward.5} parent=0 // pred_check
    %p15 = pneg %p14
  $region11: #{resblock_forward.5} parent=0 // pred_check_branch
    %17 = sbr.rel (%p15) target = $region13
  $region12: #{resblock_forward.5} parent=0 // pred_region
    %18 = vst [vmem:[%s2] sm:$0xff] 0.0
    %19 = vst [vmem:[%s2 + $0x8] sm:$0xff] 0.0
    %20 = vst [vmem:[%s2 + $0x10] sm:$0xff] 0.0
    %21 = vst [vmem:[%s2 + $0x18] sm:$0xff] 0.0
    %22 = vst [vmem:[%s2 + $0x20] sm:$0xff] 0.0
    %23 = vst [vmem:[%s2 + $0x28] sm:$0xff] 0.0
    %24 = vst [vmem:[%s2 + $0x30] sm:$0xff] 0.0
    %25 = vst [vmem:[%s2 + $0x38] sm:$0xff] 0.0
    %26 = vst [vmem:[%s2 + $0x40] sm:$0xff] 0.0
    %27 = vst [vmem:[%s2 + $0x48] sm:$0xff] 0.0
    %28 = vst [vmem:[%s2 + $0x50] sm:$0xff] 0.0
    %29 = vst [vmem:[%s2 + $0x58] sm:$0xff] 0.0
    %30 = vst [vmem:[%s2 + $0x60] sm:$0xff] 0.0
    %31 = vst [vmem:[%s2 + $0x68] sm:$0xff] 0.0
    %32 = vst [vmem:[%s2 + $0x70] sm:$0xff] 0.0
    %33 = vst [vmem:[%s2 + $0x78] sm:$0xff] 0.0
  $region13: #{resblock_forward.5} parent=0 // pred_fallthru
    _
  %v34 = vld [vmem:[%s2] sm:$0xff]
  %v35 = vld [vmem:[%s2 + $0x8] sm:$0xff]
  %v36 = vld [vmem:[%s2 + $0x10] sm:$0xff]
  %v37 = vld [vmem:[%s2 + $0x18] sm:$0xff]
  %v38 = vld [vmem:[%s2 + $0x20] sm:$0xff]
  %v39 = vld [vmem:[%s2 + $0x28] sm:$0xff]
  %v40 = vld [vmem:[%s2 + $0x30] sm:$0xff]
  %v41 = vld [vmem:[%s2 + $0x38] sm:$0xff]
  %v42 = vld [vmem:[%s2 + $0x40] sm:$0xff]
  %v43 = vld [vmem:[%s2 + $0x48] sm:$0xff]
  %v44 = vld [vmem:[%s2 + $0x50] sm:$0xff]
  %v45 = vld [vmem:[%s2 + $0x58] sm:$0xff]
  %v46 = vld [vmem:[%s2 + $0x60] sm:$0xff]
  %v47 = vld [vmem:[%s2 + $0x68] sm:$0xff]
  %v48 = vld [vmem:[%s2 + $0x70] sm:$0xff]
  %v49 = vld [vmem:[%s2 + $0x78] sm:$0xff]
  %v50 = vld [vmem:[%s0] sm:$0xf]
  %v51 = vld [vmem:[%s0 + $0x4] sm:$0xf]
  %v52 = vld [vmem:[%s0 + $0x8] sm:$0xf]
  %v53 = vld [vmem:[%s0 + $0xc] sm:$0xf]
  %v54 = vld [vmem:[%s0 + $0x10] sm:$0xf]
  %v55 = vld [vmem:[%s0 + $0x14] sm:$0xf]
  %v56 = vld [vmem:[%s0 + $0x18] sm:$0xf]
  %v57 = vld [vmem:[%s0 + $0x1c] sm:$0xf]
  %v58 = vld [vmem:[%s0 + $0x20] sm:$0xf]
  %v59 = vld [vmem:[%s0 + $0x24] sm:$0xf]
  %v60 = vld [vmem:[%s0 + $0x28] sm:$0xf]
  %v61 = vld [vmem:[%s0 + $0x2c] sm:$0xf]
  %v62 = vld [vmem:[%s0 + $0x30] sm:$0xf]
  %v63 = vld [vmem:[%s0 + $0x34] sm:$0xf]
  %v64 = vld [vmem:[%s0 + $0x38] sm:$0xf]
  %v65 = vld [vmem:[%s0 + $0x3c] sm:$0xf]
  %v66 = vld [vmem:[%s1] sm:$0xf]
  %v67 = vld [vmem:[%s1 + $0x4] sm:$0xf]
  %v68 = vld [vmem:[%s1 + $0x8] sm:$0xf]
  %v69 = vld [vmem:[%s1 + $0xc] sm:$0xf]
  %v70 = vld [vmem:[%s1 + $0x10] sm:$0xf]
  %v71 = vld [vmem:[%s1 + $0x14] sm:$0xf]
  %v72 = vld [vmem:[%s1 + $0x18] sm:$0xf]
  %v73 = vld [vmem:[%s1 + $0x1c] sm:$0xf]
  %v74 = vld [vmem:[%s1 + $0x20] sm:$0xf]
  %v75 = vld [vmem:[%s1 + $0x24] sm:$0xf]
  %v76 = vld [vmem:[%s1 + $0x28] sm:$0xf]
  %v77 = vld [vmem:[%s1 + $0x2c] sm:$0xf]
  %v78 = vld [vmem:[%s1 + $0x30] sm:$0xf]
  %v79 = vld [vmem:[%s1 + $0x34] sm:$0xf]
  %v80 = vld [vmem:[%s1 + $0x38] sm:$0xf]
  %v81 = vld [vmem:[%s1 + $0x3c] sm:$0xf]
  %v98 = vunpack.c.l.b16 %v50
  %v99 = vunpack.c.l.b16 %v51
  %v100 = vunpack.c.l.b16 %v52
  %v101 = vunpack.c.l.b16 %v53
  %v102 = vunpack.c.l.b16 %v54
  %v103 = vunpack.c.l.b16 %v55
  %v104 = vunpack.c.l.b16 %v56
  %v105 = vunpack.c.l.b16 %v57
  %v106 = vunpack.c.l.b16 %v58
  %v107 = vunpack.c.l.b16 %v59
  %v108 = vunpack.c.l.b16 %v60
  %v109 = vunpack.c.l.b16 %v61
  %v110 = vunpack.c.l.b16 %v62
  %v111 = vunpack.c.l.b16 %v63
  %v112 = vunpack.c.l.b16 %v64
  %v113 = vunpack.c.l.b16 %v65
  %v114 = vpack.c.b16 %v99, %v98
  %v115 = vpack.c.b16 %v101, %v100
  %v116 = vpack.c.b16 %v103, %v102
  %v117 = vpack.c.b16 %v105, %v104
  %v118 = vpack.c.b16 %v107, %v106
  %v119 = vpack.c.b16 %v109, %v108
  %v120 = vpack.c.b16 %v111, %v110
  %v121 = vpack.c.b16 %v113, %v112
  %v146 = vunpack.c.l.b16 %v66
  %v147 = vunpack.c.l.b16 %v67
  %v148 = vunpack.c.l.b16 %v68
  %v149 = vunpack.c.l.b16 %v69
  %v150 = vunpack.c.l.b16 %v70
  %v151 = vunpack.c.l.b16 %v71
  %v152 = vunpack.c.l.b16 %v72
  %v153 = vunpack.c.l.b16 %v73
  %v154 = vunpack.c.l.b16 %v74
  %v155 = vunpack.c.l.b16 %v75
  %v156 = vunpack.c.l.b16 %v76
  %v157 = vunpack.c.l.b16 %v77
  %v158 = vunpack.c.l.b16 %v78
  %v159 = vunpack.c.l.b16 %v79
  %v160 = vunpack.c.l.b16 %v80
  %v161 = vunpack.c.l.b16 %v81
  %v162 = vpack.c.b16 %v147, %v146
  %v163 = vpack.c.b16 %v149, %v148
  %v164 = vpack.c.b16 %v151, %v150
  %v165 = vpack.c.b16 %v153, %v152
  %v166 = vpack.c.b16 %v155, %v154
  %v167 = vpack.c.b16 %v157, %v156
  %v168 = vpack.c.b16 %v159, %v158
  %v169 = vpack.c.b16 %v161, %v160
  %178 = vmatprep.subr.bf16.mxu0 0
  %179 = vmatpush1.bf16.msra.mxu0 %v162
  %180 = vmatprep.subr.bf16.mxu0 0
  %181 = vmatpush1.bf16.msra.mxu0 %v163
  %182 = vmatprep.subr.bf16.mxu0 0
  %183 = vmatpush1.bf16.msra.mxu0 %v164
  %184 = vmatprep.subr.bf16.mxu0 0
  %185 = vmatpush1.bf16.msra.mxu0 %v165
  %186 = vmatprep.subr.bf16.mxu0 0
  %187 = vmatpush1.bf16.msra.mxu0 %v166
  %188 = vmatprep.subr.bf16.mxu0 0
  %189 = vmatpush1.bf16.msra.mxu0 %v167
  %190 = vmatprep.subr.bf16.mxu0 0
  %191 = vmatpush1.bf16.msra.mxu0 %v168
  %192 = vmatprep.subr.bf16.mxu0 0
  %193 = vmatpush1.bf16.msra.mxu0 %v169
  %194 = vmatprep.subr.bf16.mxu0 0
  %195 = vmatpush1.bf16.msra.mxu0 0
  %196 = vmatprep.subr.bf16.mxu0 0
  %197 = vmatpush1.bf16.msra.mxu0 0
  %198 = vmatprep.subr.bf16.mxu0 0
  %199 = vmatpush1.bf16.msra.mxu0 0
  %200 = vmatprep.subr.bf16.mxu0 0
  %201 = vmatpush1.bf16.msra.mxu0 0
  %202 = vmatprep.subr.bf16.mxu0 0
  %203 = vmatpush1.bf16.msra.mxu0 0
  %204 = vmatprep.subr.bf16.mxu0 0
  %205 = vmatpush1.bf16.msra.mxu0 0
  %206 = vmatprep.subr.bf16.mxu0 0
  %207 = vmatpush1.bf16.msra.mxu0 0
  %208 = vmatprep.subr.bf16.mxu0 0
  %209 = vmatpush1.bf16.msra.mxu0 0
  %210 = vmatprep.mubr.bf16.mxu0 0
  %211 = vmatmul.mubr.bf16.gmra.mrb[0].mxu0 %v114
  %v212 = vpop.f32.mrb[0].mxu0
  %v213 = vadd.f32 0.0, %v212
  %v214 = vpop.f32.mrb[0].mxu0
  %v215 = vpop.f32.mrb[0].mxu0
  %v216 = vadd.f32 0.0, %v215
  %v217 = vpop.f32.mrb[0].mxu0
  %218 = vmatprep.mubr.bf16.mxu0 0
  %219 = vmatmul.mubr.bf16.gmra.mrb[0].mxu0 %v115
  %v220 = vpop.f32.mrb[0].mxu0
  %v221 = vadd.f32 0.0, %v220
  %v222 = vpop.f32.mrb[0].mxu0
  %v223 = vpop.f32.mrb[0].mxu0
  %v224 = vadd.f32 0.0, %v223
  %v225 = vpop.f32.mrb[0].mxu0
  %226 = vmatprep.mubr.bf16.mxu0 0
  %227 = vmatmul.mubr.bf16.gmra.mrb[0].mxu0 %v116
  %v228 = vpop.f32.mrb[0].mxu0
  %v229 = vadd.f32 0.0, %v228
  %v230 = vpop.f32.mrb[0].mxu0
  %v231 = vpop.f32.mrb[0].mxu0
  %v232 = vadd.f32 0.0, %v231
  %v233 = vpop.f32.mrb[0].mxu0
  %234 = vmatprep.mubr.bf16.mxu0 0
  %235 = vmatmul.mubr.bf16.gmra.mrb[0].mxu0 %v117
  %v236 = vpop.f32.mrb[0].mxu0
  %v237 = vadd.f32 0.0, %v236
  %v238 = vpop.f32.mrb[0].mxu0
  %v239 = vpop.f32.mrb[0].mxu0
  %v240 = vadd.f32 0.0, %v239
  %v241 = vpop.f32.mrb[0].mxu0
  %242 = vmatprep.mubr.bf16.mxu0 0
  %243 = vmatmul.mubr.bf16.gmra.mrb[0].mxu0 %v118
  %v244 = vpop.f32.mrb[0].mxu0
  %v245 = vadd.f32 0.0, %v244
  %v246 = vpop.f32.mrb[0].mxu0
  %v247 = vpop.f32.mrb[0].mxu0
  %v248 = vadd.f32 0.0, %v247
  %v249 = vpop.f32.mrb[0].mxu0
  %250 = vmatprep.mubr.bf16.mxu0 0
  %251 = vmatmul.mubr.bf16.gmra.mrb[0].mxu0 %v119
  %v252 = vpop.f32.mrb[0].mxu0
  %v253 = vadd.f32 0.0, %v252
  %v254 = vpop.f32.mrb[0].mxu0
  %v255 = vpop.f32.mrb[0].mxu0
  %v256 = vadd.f32 0.0, %v255
  %v257 = vpop.f32.mrb[0].mxu0
  %258 = vmatprep.mubr.bf16.mxu0 0
  %259 = vmatmul.mubr.bf16.gmra.mrb[0].mxu0 %v120
  %v260 = vpop.f32.mrb[0].mxu0
  %v261 = vadd.f32 0.0, %v260
  %v262 = vpop.f32.mrb[0].mxu0
  %v263 = vpop.f32.mrb[0].mxu0
  %v264 = vadd.f32 0.0, %v263
  %v265 = vpop.f32.mrb[0].mxu0
  %266 = vmatprep.mubr.bf16.mxu0 0
  %267 = vmatmul.mubr.bf16.gmra.mrb[0].mxu0 %v121
  %v268 = vpop.f32.mrb[0].mxu0
  %v269 = vadd.f32 0.0, %v268
  %v270 = vpop.f32.mrb[0].mxu0
  %v271 = vpop.f32.mrb[0].mxu0
  %v272 = vadd.f32 0.0, %v271
  %v273 = vpop.f32.mrb[0].mxu0
  %274 = vdwg.mxu0
  %v275 = vadd.f32 %v34, %v213
  %v276 = vadd.f32 %v35, %v216
  %v277 = vadd.f32 %v36, %v221
  %v278 = vadd.f32 %v37, %v224
  %v279 = vadd.f32 %v38, %v229
  %v280 = vadd.f32 %v39, %v232
  %v281 = vadd.f32 %v40, %v237
  %v282 = vadd.f32 %v41, %v240
  %v283 = vadd.f32 %v42, %v245
  %v284 = vadd.f32 %v43, %v248
  %v285 = vadd.f32 %v44, %v253
  %v286 = vadd.f32 %v45, %v256
  %v287 = vadd.f32 %v46, %v261
  %v288 = vadd.f32 %v47, %v264
  %v289 = vadd.f32 %v48, %v269
  %v290 = vadd.f32 %v49, %v272
  %291 = vst [vmem:[%s2] sm:$0xff] %v275
  %292 = vst [vmem:[%s2 + $0x8] sm:$0xff] %v276
  %293 = vst [vmem:[%s2 + $0x10] sm:$0xff] %v277
  %294 = vst [vmem:[%s2 + $0x18] sm:$0xff] %v278
  %295 = vst [vmem:[%s2 + $0x20] sm:$0xff] %v279
  %296 = vst [vmem:[%s2 + $0x28] sm:$0xff] %v280
  %297 = vst [vmem:[%s2 + $0x30] sm:$0xff] %v281
  %298 = vst [vmem:[%s2 + $0x38] sm:$0xff] %v282
  %299 = vst [vmem:[%s2 + $0x40] sm:$0xff] %v283
  %300 = vst [vmem:[%s2 + $0x48] sm:$0xff] %v284
  %301 = vst [vmem:[%s2 + $0x50] sm:$0xff] %v285
  %302 = vst [vmem:[%s2 + $0x58] sm:$0xff] %v286
  %303 = vst [vmem:[%s2 + $0x60] sm:$0xff] %v287
  %304 = vst [vmem:[%s2 + $0x68] sm:$0xff] %v288
  %305 = vst [vmem:[%s2 + $0x70] sm:$0xff] %v289
  %306 = vst [vmem:[%s2 + $0x78] sm:$0xff] %v290
  // Predicated region
  $region14: #{resblock_forward.5} parent=0 // pred_check
    %p307 = pneg %p14
  $region15: #{resblock_forward.5} parent=0 // pred_check_branch
    %309 = sbr.rel (%p307) target = $region17
  $region16: #{resblock_forward.5} parent=0 // pred_region
    %v310 = vld [vmem:[%s2] sm:$0xff]
    %v311 = vld [vmem:[%s2 + $0x8] sm:$0xff]
    %v312 = vld [vmem:[%s2 + $0x10] sm:$0xff]
    %v313 = vld [vmem:[%s2 + $0x18] sm:$0xff]
    %v314 = vld [vmem:[%s2 + $0x20] sm:$0xff]
    %v315 = vld [vmem:[%s2 + $0x28] sm:$0xff]
    %v316 = vld [vmem:[%s2 + $0x30] sm:$0xff]
    %v317 = vld [vmem:[%s2 + $0x38] sm:$0xff]
    %v318 = vld [vmem:[%s2 + $0x40] sm:$0xff]
    %v319 = vld [vmem:[%s2 + $0x48] sm:$0xff]
    %v320 = vld [vmem:[%s2 + $0x50] sm:$0xff]
    %v321 = vld [vmem:[%s2 + $0x58] sm:$0xff]
    %v322 = vld [vmem:[%s2 + $0x60] sm:$0xff]
    %v323 = vld [vmem:[%s2 + $0x68] sm:$0xff]
    %v324 = vld [vmem:[%s2 + $0x70] sm:$0xff]
    %v325 = vld [vmem:[%s2 + $0x78] sm:$0xff]
    %v326 = vadd.f32 %v310, %v311
    %v327 = vadd.f32 %v326, %v312
    %v328 = vadd.f32 %v327, %v313
    %v329 = vadd.f32 %v328, %v314
    %v330 = vadd.f32 %v329, %v315
    %v331 = vadd.f32 %v330, %v316
    %v332 = vadd.f32 %v331, %v317
    %v333 = vadd.f32 %v332, %v318
    %v334 = vadd.f32 %v333, %v319
    %v335 = vadd.f32 %v334, %v320
    %v336 = vadd.f32 %v335, %v321
    %v337 = vadd.f32 %v336, %v322
    %v338 = vadd.f32 %v337, %v323
    %v339 = vadd.f32 %v338, %v324
    %v340 = vadd.f32 %v339, %v325
    %v341 = vrot.slane %v340, 4
    %v342 = vadd.f32 %v340, %v341
    %v343 = vrot.slane %v342, 2
    %v344 = vadd.f32 %v342, %v343
    %v345 = vrot.slane %v344, 1
    %v346 = vadd.f32 %v344, %v345
    %v347 = vmul.f32 %v310, %v310
    %v348 = vmul.f32 %v311, %v311
    %v349 = vmul.f32 %v312, %v312
    %v350 = vmul.f32 %v313, %v313
    %v351 = vmul.f32 %v314, %v314
    %v352 = vmul.f32 %v315, %v315
    %v353 = vmul.f32 %v316, %v316
    %v354 = vmul.f32 %v317, %v317
    %v355 = vmul.f32 %v318, %v318
    %v356 = vmul.f32 %v319, %v319
    %v357 = vmul.f32 %v320, %v320
    %v358 = vmul.f32 %v321, %v321
    %v359 = vmul.f32 %v322, %v322
    %v360 = vmul.f32 %v323, %v323
    %v361 = vmul.f32 %v324, %v324
    %v362 = vmul.f32 %v325, %v325
    %v363 = vadd.f32 %v347, %v348
    %v364 = vadd.f32 %v363, %v349
    %v365 = vadd.f32 %v364, %v350
    %v366 = vadd.f32 %v365, %v351
    %v367 = vadd.f32 %v366, %v352
    %v368 = vadd.f32 %v367, %v353
    %v369 = vadd.f32 %v368, %v354
    %v370 = vadd.f32 %v369, %v355
    %v371 = vadd.f32 %v370, %v356
    %v372 = vadd.f32 %v371, %v357
    %v373 = vadd.f32 %v372, %v358
    %v374 = vadd.f32 %v373, %v359
    %v375 = vadd.f32 %v374, %v360
    %v376 = vadd.f32 %v375, %v361
    %v377 = vadd.f32 %v376, %v362
    %v378 = vrot.slane %v377, 4
    %v379 = vadd.f32 %v377, %v378
    %v380 = vrot.slane %v379, 2
    %v381 = vadd.f32 %v379, %v380
    %v382 = vrot.slane %v381, 1
    %v383 = vadd.f32 %v381, %v382
    %v384 = vlaneseq
    %v385 = vshrl.u32 %v384, 7
    %vm386 = vcmp.eq.s32.totalorder %v385, 0
    %vm387 = vcmp.eq.s32.totalorder %v385, 1
    %v388 = vsel %vm387, %v383, 0.0
    %v389 = vsel %vm386, %v346, %v388
    %390 = vst [vmem:[%s3] sm:$0xff] %v389
  $region17: #{resblock_forward.5} parent=0 // pred_fallthru
    _
  // Predicated region
  $region18: #{resblock_forward.5} parent=0 // pred_check
    _
  $region19: #{resblock_forward.5} parent=0 // pred_check_branch
    %392 = sbr.rel (0) target = $region21
  $region20: #{resblock_forward.5} parent=0 // pred_region
    _
  $region21: #{resblock_forward.5} parent=0 // pred_fallthru
    _
  // Predicated region
  $region22: #{resblock_forward.5} parent=0 // pred_check
    _
  $region23: #{resblock_forward.5} parent=0 // pred_check_branch
    %394 = sbr.rel (0) target = $region25
  $region24: #{resblock_forward.5} parent=0 // pred_region
    _
  $region25: #{resblock_forward.5} parent=0 // pred_fallthru
    _
  // Predicated region
  $region26: #{resblock_forward.5} parent=0 // pred_check
    _
  $region27: #{resblock_forward.5} parent=0 // pred_check_branch
    %396 = sbr.rel (0) target = $region29
  $region28: #{resblock_forward.5} parent=0 // pred_region
    _
  $region29: #{resblock_forward.5} parent=0 // pred_fallthru
    _
  // Predicated region
  $region30: #{resblock_forward.5} parent=0 // pred_check
    _
  $region31: #{resblock_forward.5} parent=0 // pred_check_branch
    %398 = sbr.rel (0) target = $region33
  $region32: #{resblock_forward.5} parent=0 // pred_region
    _
  $region33: #{resblock_forward.5} parent=0 // pred_fallthru
    _

// kernel: resblock_forward.7
$region0: #{resblock_forward.7}
  #allocation0 [shape = 'u32[]', space=smem, size = 0x4, offset = 0x4, fixed_abs, tag = 'smem constant byte address 0x4 - core index']
  #allocation1 [shape = 'u32[144,128]{1,0:T(1,128)}', space=vmem, size = 0x12000, scoped, tag = 'internal scratch']
  %s0 = inlined_call_operand.vmem [shape: bf16[128,256], index: 0, kind: input, shape index: {}]
  %s1 = inlined_call_operand.vmem [shape: bf16[256,128], index: 1, kind: input, shape index: {}]
  %s2 = inlined_call_operand.vmem [shape: f32[128,128], index: 2, kind: output, shape index: {0}]
  %s3 = inlined_call_operand.vmem [shape: f32[8,128], index: 3, kind: output, shape index: {1}]
  %4 = xla_tuple %s2, %s3
  %s5 = sld [smem:[#allocation0]]
  $region34: #{resblock_forward.7} parent=0
    _
  %s7 = ssub.s32 1, %s5
  %s8 = scalar_select 0, %s7, %s5
  // Predicated region
  $region2: #{resblock_forward.7} parent=0 // pred_check
    _
  $region3: #{resblock_forward.7} parent=0 // pred_check_branch
    %10 = sbr.rel (0) target = $region5
  $region4: #{resblock_forward.7} parent=0 // pred_region
    _
  $region5: #{resblock_forward.7} parent=0 // pred_fallthru
    _
  // Predicated region
  $region6: #{resblock_forward.7} parent=0 // pred_check
    _
  $region7: #{resblock_forward.7} parent=0 // pred_check_branch
    %12 = sbr.rel (0) target = $region9
  $region8: #{resblock_forward.7} parent=0 // pred_region
    _
  $region9: #{resblock_forward.7} parent=0 // pred_fallthru
    _
  %p14 = scmp.eq.s32.totalorder 0, 0
  // Predicated region
  $region10: #{resblock_forward.7} parent=0 // pred_check
    %p15 = pneg %p14
  $region11: #{resblock_forward.7} parent=0 // pred_check_branch
    %17 = sbr.rel (%p15) target = $region13
  $region12: #{resblock_forward.7} parent=0 // pred_region
    %18 = vst [vmem:[%s2] sm:$0xff] 0.0
    %19 = vst [vmem:[%s2 + $0x8] sm:$0xff] 0.0
    %20 = vst [vmem:[%s2 + $0x10] sm:$0xff] 0.0
    %21 = vst [vmem:[%s2 + $0x18] sm:$0xff] 0.0
    %22 = vst [vmem:[%s2 + $0x20] sm:$0xff] 0.0
    %23 = vst [vmem:[%s2 + $0x28] sm:$0xff] 0.0
    %24 = vst [vmem:[%s2 + $0x30] sm:$0xff] 0.0
    %25 = vst [vmem:[%s2 + $0x38] sm:$0xff] 0.0
    %26 = vst [vmem:[%s2 + $0x40] sm:$0xff] 0.0
    %27 = vst [vmem:[%s2 + $0x48] sm:$0xff] 0.0
    %28 = vst [vmem:[%s2 + $0x50] sm:$0xff] 0.0
    %29 = vst [vmem:[%s2 + $0x58] sm:$0xff] 0.0
    %30 = vst [vmem:[%s2 + $0x60] sm:$0xff] 0.0
    %31 = vst [vmem:[%s2 + $0x68] sm:$0xff] 0.0
    %32 = vst [vmem:[%s2 + $0x70] sm:$0xff] 0.0
    %33 = vst [vmem:[%s2 + $0x78] sm:$0xff] 0.0
  $region13: #{resblock_forward.7} parent=0 // pred_fallthru
    _
  %v34 = vld [vmem:[%s2] sm:$0xff]
  %v35 = vld [vmem:[%s2 + $0x8] sm:$0xff]
  %v36 = vld [vmem:[%s2 + $0x10] sm:$0xff]
  %v37 = vld [vmem:[%s2 + $0x18] sm:$0xff]
  %v38 = vld [vmem:[%s2 + $0x20] sm:$0xff]
  %v39 = vld [vmem:[%s2 + $0x28] sm:$0xff]
  %v40 = vld [vmem:[%s2 + $0x30] sm:$0xff]
  %v41 = vld [vmem:[%s2 + $0x38] sm:$0xff]
  %v42 = vld [vmem:[%s2 + $0x40] sm:$0xff]
  %v43 = vld [vmem:[%s2 + $0x48] sm:$0xff]
  %v44 = vld [vmem:[%s2 + $0x50] sm:$0xff]
  %v45 = vld [vmem:[%s2 + $0x58] sm:$0xff]
  %v46 = vld [vmem:[%s2 + $0x60] sm:$0xff]
  %v47 = vld [vmem:[%s2 + $0x68] sm:$0xff]
  %v48 = vld [vmem:[%s2 + $0x70] sm:$0xff]
  %v49 = vld [vmem:[%s2 + $0x78] sm:$0xff]
  %v50 = vld [vmem:[%s0] sm:$0xff]
  %v51 = vld [vmem:[%s0 + $0x8] sm:$0xff]
  %v52 = vld [vmem:[%s0 + $0x10] sm:$0xff]
  %v53 = vld [vmem:[%s0 + $0x18] sm:$0xff]
  %v54 = vld [vmem:[%s0 + $0x20] sm:$0xff]
  %v55 = vld [vmem:[%s0 + $0x28] sm:$0xff]
  %v56 = vld [vmem:[%s0 + $0x30] sm:$0xff]
  %v57 = vld [vmem:[%s0 + $0x38] sm:$0xff]
  %v58 = vld [vmem:[%s0 + $0x40] sm:$0xff]
  %v59 = vld [vmem:[%s0 + $0x48] sm:$0xff]
  %v60 = vld [vmem:[%s0 + $0x50] sm:$0xff]
  %v61 = vld [vmem:[%s0 + $0x58] sm:$0xff]
  %v62 = vld [vmem:[%s0 + $0x60] sm:$0xff]
  %v63 = vld [vmem:[%s0 + $0x68] sm:$0xff]
  %v64 = vld [vmem:[%s0 + $0x70] sm:$0xff]
  %v65 = vld [vmem:[%s0 + $0x78] sm:$0xff]
  %v66 = vld [vmem:[%s1] sm:$0xf]
  %v67 = vld [vmem:[%s1 + $0x4] sm:$0xf]
  %v68 = vld [vmem:[%s1 + $0x8] sm:$0xf]
  %v69 = vld [vmem:[%s1 + $0xc] sm:$0xf]
  %v70 = vld [vmem:[%s1 + $0x10] sm:$0xf]
  %v71 = vld [vmem:[%s1 + $0x14] sm:$0xf]
  %v72 = vld [vmem:[%s1 + $0x18] sm:$0xf]
  %v73 = vld [vmem:[%s1 + $0x1c] sm:$0xf]
  %v74 = vld [vmem:[%s1 + $0x20] sm:$0xf]
  %v75 = vld [vmem:[%s1 + $0x24] sm:$0xf]
  %v76 = vld [vmem:[%s1 + $0x28] sm:$0xf]
  %v77 = vld [vmem:[%s1 + $0x2c] sm:$0xf]
  %v78 = vld [vmem:[%s1 + $0x30] sm:$0xf]
  %v79 = vld [vmem:[%s1 + $0x34] sm:$0xf]
  %v80 = vld [vmem:[%s1 + $0x38] sm:$0xf]
  %v81 = vld [vmem:[%s1 + $0x3c] sm:$0xf]
  %v82 = vld [vmem:[%s1 + $0x40] sm:$0xf]
  %v83 = vld [vmem:[%s1 + $0x44] sm:$0xf]
  %v84 = vld [vmem:[%s1 + $0x48] sm:$0xf]
  %v85 = vld [vmem:[%s1 + $0x4c] sm:$0xf]
  %v86 = vld [vmem:[%s1 + $0x50] sm:$0xf]
  %v87 = vld [vmem:[%s1 + $0x54] sm:$0xf]
  %v88 = vld [vmem:[%s1 + $0x58] sm:$0xf]
  %v89 = vld [vmem:[%s1 + $0x5c] sm:$0xf]
  %v90 = vld [vmem:[%s1 + $0x60] sm:$0xf]
  %v91 = vld [vmem:[%s1 + $0x64] sm:$0xf]
  %v92 = vld [vmem:[%s1 + $0x68] sm:$0xf]
  %v93 = vld [vmem:[%s1 + $0x6c] sm:$0xf]
  %v94 = vld [vmem:[%s1 + $0x70] sm:$0xf]
  %v95 = vld [vmem:[%s1 + $0x74] sm:$0xf]
  %v96 = vld [vmem:[%s1 + $0x78] sm:$0xf]
  %v97 = vld [vmem:[%s1 + $0x7c] sm:$0xf]
  %v114 = vunpack.c.l.b16 %v50
  %v115 = vunpack.c.h.b16 %v50
  %v116 = vunpack.c.l.b16 %v51
  %v117 = vunpack.c.h.b16 %v51
  %v118 = vunpack.c.l.b16 %v52
  %v119 = vunpack.c.h.b16 %v52
  %v120 = vunpack.c.l.b16 %v53
  %v121 = vunpack.c.h.b16 %v53
  %v122 = vunpack.c.l.b16 %v54
  %v123 = vunpack.c.h.b16 %v54
  %v124 = vunpack.c.l.b16 %v55
  %v125 = vunpack.c.h.b16 %v55
  %v126 = vunpack.c.l.b16 %v56
  %v127 = vunpack.c.h.b16 %v56
  %v128 = vunpack.c.l.b16 %v57
  %v129 = vunpack.c.h.b16 %v57
  %v130 = vunpack.c.l.b16 %v58
  %v131 = vunpack.c.h.b16 %v58
  %v132 = vunpack.c.l.b16 %v59
  %v133 = vunpack.c.h.b16 %v59
  %v134 = vunpack.c.l.b16 %v60
  %v135 = vunpack.c.h.b16 %v60
  %v136 = vunpack.c.l.b16 %v61
  %v137 = vunpack.c.h.b16 %v61
  %v138 = vunpack.c.l.b16 %v62
  %v139 = vunpack.c.h.b16 %v62
  %v140 = vunpack.c.l.b16 %v63
  %v141 = vunpack.c.h.b16 %v63
  %v142 = vunpack.c.l.b16 %v64
  %v143 = vunpack.c.h.b16 %v64
  %v144 = vunpack.c.l.b16 %v65
  %v145 = vunpack.c.h.b16 %v65
  %v146 = vpack.c.b16 %v116, %v114
  %v147 = vpack.c.b16 %v117, %v115
  %v148 = vpack.c.b16 %v120, %v118
  %v149 = vpack.c.b16 %v121, %v119
  %v150 = vpack.c.b16 %v124, %v122
  %v151 = vpack.c.b16 %v125, %v123
  %v152 = vpack.c.b16 %v128, %v126
  %v153 = vpack.c.b16 %v129, %v127
  %v154 = vpack.c.b16 %v132, %v130
  %v155 = vpack.c.b16 %v133, %v131
  %v156 = vpack.c.b16 %v136, %v134
  %v157 = vpack.c.b16 %v137, %v135
  %v158 = vpack.c.b16 %v140, %v138
  %v159 = vpack.c.b16 %v141, %v139
  %v160 = vpack.c.b16 %v144, %v142
  %v161 = vpack.c.b16 %v145, %v143
  %v210 = vunpack.c.l.b16 %v66
  %v211 = vunpack.c.l.b16 %v67
  %v212 = vunpack.c.l.b16 %v68
  %v213 = vunpack.c.l.b16 %v69
  %v214 = vunpack.c.l.b16 %v70
  %v215 = vunpack.c.l.b16 %v71
  %v216 = vunpack.c.l.b16 %v72
  %v217 = vunpack.c.l.b16 %v73
  %v218 = vunpack.c.l.b16 %v74
  %v219 = vunpack.c.l.b16 %v75
  %v220 = vunpack.c.l.b16 %v76
  %v221 = vunpack.c.l.b16 %v77
  %v222 = vunpack.c.l.b16 %v78
  %v223 = vunpack.c.l.b16 %v79
  %v224 = vunpack.c.l.b16 %v80
  %v225 = vunpack.c.l.b16 %v81
  %v226 = vunpack.c.l.b16 %v82
  %v227 = vunpack.c.l.b16 %v83
  %v228 = vunpack.c.l.b16 %v84
  %v229 = vunpack.c.l.b16 %v85
  %v230 = vunpack.c.l.b16 %v86
  %v231 = vunpack.c.l.b16 %v87
  %v232 = vunpack.c.l.b16 %v88
  %v233 = vunpack.c.l.b16 %v89
  %v234 = vunpack.c.l.b16 %v90
  %v235 = vunpack.c.l.b16 %v91
  %v236 = vunpack.c.l.b16 %v92
  %v237 = vunpack.c.l.b16 %v93
  %v238 = vunpack.c.l.b16 %v94
  %v239 = vunpack.c.l.b16 %v95
  %v240 = vunpack.c.l.b16 %v96
  %v241 = vunpack.c.l.b16 %v97
  %v242 = vpack.c.b16 %v211, %v210
  %v243 = vpack.c.b16 %v213, %v212
  %v244 = vpack.c.b16 %v215, %v214
  %v245 = vpack.c.b16 %v217, %v216
  %v246 = vpack.c.b16 %v219, %v218
  %v247 = vpack.c.b16 %v221, %v220
  %v248 = vpack.c.b16 %v223, %v222
  %v249 = vpack.c.b16 %v225, %v224
  %v250 = vpack.c.b16 %v227, %v226
  %v251 = vpack.c.b16 %v229, %v228
  %v252 = vpack.c.b16 %v231, %v230
  %v253 = vpack.c.b16 %v233, %v232
  %v254 = vpack.c.b16 %v235, %v234
  %v255 = vpack.c.b16 %v237, %v236
  %v256 = vpack.c.b16 %v239, %v238
  %v257 = vpack.c.b16 %v241, %v240
  %274 = vmatprep.subr.bf16.mxu0 0
  %275 = vmatpush1.bf16.msra.mxu0 %v242
  %276 = vmatprep.subr.bf16.mxu0 0
  %277 = vmatpush1.bf16.msra.mxu0 %v243
  %278 = vmatprep.subr.bf16.mxu0 0
  %279 = vmatpush1.bf16.msra.mxu0 %v244
  %280 = vmatprep.subr.bf16.mxu0 0
  %281 = vmatpush1.bf16.msra.mxu0 %v245
  %282 = vmatprep.subr.bf16.mxu0 0
  %283 = vmatpush1.bf16.msra.mxu0 %v246
  %284 = vmatprep.subr.bf16.mxu0 0
  %285 = vmatpush1.bf16.msra.mxu0 %v247
  %286 = vmatprep.subr.bf16.mxu0 0
  %287 = vmatpush1.bf16.msra.mxu0 %v248
  %288 = vmatprep.subr.bf16.mxu0 0
  %289 = vmatpush1.bf16.msra.mxu0 %v249
  %290 = vmatprep.subr.bf16.mxu0 0
  %291 = vmatpush1.bf16.msra.mxu0 %v250
  %292 = vmatprep.subr.bf16.mxu0 0
  %293 = vmatpush1.bf16.msra.mxu0 %v251
  %294 = vmatprep.subr.bf16.mxu0 0
  %295 = vmatpush1.bf16.msra.mxu0 %v252
  %296 = vmatprep.subr.bf16.mxu0 0
  %297 = vmatpush1.bf16.msra.mxu0 %v253
  %298 = vmatprep.subr.bf16.mxu0 0
  %299 = vmatpush1.bf16.msra.mxu0 %v254
  %300 = vmatprep.subr.bf16.mxu0 0
  %301 = vmatpush1.bf16.msra.mxu0 %v255
  %302 = vmatprep.subr.bf16.mxu0 0
  %303 = vmatpush1.bf16.msra.mxu0 %v256
  %304 = vmatprep.subr.bf16.mxu0 0
  %305 = vmatpush1.bf16.msra.mxu0 %v257
  %306 = vmatprep.mubr.bf16.mxu0 %v147
  %307 = vmatmul.mubr.bf16.gmra.mrb[0].mxu0 %v146
  %v308 = vpop.f32.mrb[0].mxu0
  %v309 = vadd.f32 0.0, %v308
  %v310 = vpop.f32.mrb[0].mxu0
  %v311 = vpop.f32.mrb[0].mxu0
  %v312 = vadd.f32 0.0, %v311
  %v313 = vpop.f32.mrb[0].mxu0
  %314 = vmatprep.mubr.bf16.mxu0 %v149
  %315 = vmatmul.mubr.bf16.gmra.mrb[0].mxu0 %v148
  %v316 = vpop.f32.mrb[0].mxu0
  %v317 = vadd.f32 0.0, %v316
  %v318 = vpop.f32.mrb[0].mxu0
  %v319 = vpop.f32.mrb[0].mxu0
  %v320 = vadd.f32 0.0, %v319
  %v321 = vpop.f32.mrb[0].mxu0
  %322 = vmatprep.mubr.bf16.mxu0 %v151
  %323 = vmatmul.mubr.bf16.gmra.mrb[0].mxu0 %v150
  %v324 = vpop.f32.mrb[0].mxu0
  %v325 = vadd.f32 0.0, %v324
  %v326 = vpop.f32.mrb[0].mxu0
  %v327 = vpop.f32.mrb[0].mxu0
  %v328 = vadd.f32 0.0, %v327
  %v329 = vpop.f32.mrb[0].mxu0
  %330 = vmatprep.mubr.bf16.mxu0 %v153
  %331 = vmatmul.mubr.bf16.gmra.mrb[0].mxu0 %v152
  %v332 = vpop.f32.mrb[0].mxu0
  %v333 = vadd.f32 0.0, %v332
  %v334 = vpop.f32.mrb[0].mxu0
  %v335 = vpop.f32.mrb[0].mxu0
  %v336 = vadd.f32 0.0, %v335
  %v337 = vpop.f32.mrb[0].mxu0
  %338 = vmatprep.mubr.bf16.mxu0 %v155
  %339 = vmatmul.mubr.bf16.gmra.mrb[0].mxu0 %v154
  %v340 = vpop.f32.mrb[0].mxu0
  %v341 = vadd.f32 0.0, %v340
  %v342 = vpop.f32.mrb[0].mxu0
  %v343 = vpop.f32.mrb[0].mxu0
  %v344 = vadd.f32 0.0, %v343
  %v345 = vpop.f32.mrb[0].mxu0
  %346 = vmatprep.mubr.bf16.mxu0 %v157
  %347 = vmatmul.mubr.bf16.gmra.mrb[0].mxu0 %v156
  %v348 = vpop.f32.mrb[0].mxu0
  %v349 = vadd.f32 0.0, %v348
  %v350 = vpop.f32.mrb[0].mxu0
  %v351 = vpop.f32.mrb[0].mxu0
  %v352 = vadd.f32 0.0, %v351
  %v353 = vpop.f32.mrb[0].mxu0
  %354 = vmatprep.mubr.bf16.mxu0 %v159
  %355 = vmatmul.mubr.bf16.gmra.mrb[0].mxu0 %v158
  %v356 = vpop.f32.mrb[0].mxu0
  %v357 = vadd.f32 0.0, %v356
  %v358 = vpop.f32.mrb[0].mxu0
  %v359 = vpop.f32.mrb[0].mxu0
  %v360 = vadd.f32 0.0, %v359
  %v361 = vpop.f32.mrb[0].mxu0
  %362 = vmatprep.mubr.bf16.mxu0 %v161
  %363 = vmatmul.mubr.bf16.gmra.mrb[0].mxu0 %v160
  %v364 = vpop.f32.mrb[0].mxu0
  %v365 = vadd.f32 0.0, %v364
  %v366 = vpop.f32.mrb[0].mxu0
  %v367 = vpop.f32.mrb[0].mxu0
  %v368 = vadd.f32 0.0, %v367
  %v369 = vpop.f32.mrb[0].mxu0
  %370 = vdwg.mxu0
  %v371 = vadd.f32 %v34, %v309
  %v372 = vadd.f32 %v35, %v312
  %v373 = vadd.f32 %v36, %v317
  %v374 = vadd.f32 %v37, %v320
  %v375 = vadd.f32 %v38, %v325
  %v376 = vadd.f32 %v39, %v328
  %v377 = vadd.f32 %v40, %v333
  %v378 = vadd.f32 %v41, %v336
  %v379 = vadd.f32 %v42, %v341
  %v380 = vadd.f32 %v43, %v344
  %v381 = vadd.f32 %v44, %v349
  %v382 = vadd.f32 %v45, %v352
  %v383 = vadd.f32 %v46, %v357
  %v384 = vadd.f32 %v47, %v360
  %v385 = vadd.f32 %v48, %v365
  %v386 = vadd.f32 %v49, %v368
  %387 = vst [vmem:[%s2] sm:$0xff] %v371
  %388 = vst [vmem:[%s2 + $0x8] sm:$0xff] %v372
  %389 = vst [vmem:[%s2 + $0x10] sm:$0xff] %v373
  %390 = vst [vmem:[%s2 + $0x18] sm:$0xff] %v374
  %391 = vst [vmem:[%s2 + $0x20] sm:$0xff] %v375
  %392 = vst [vmem:[%s2 + $0x28] sm:$0xff] %v376
  %393 = vst [vmem:[%s2 + $0x30] sm:$0xff] %v377
  %394 = vst [vmem:[%s2 + $0x38] sm:$0xff] %v378
  %395 = vst [vmem:[%s2 + $0x40] sm:$0xff] %v379
  %396 = vst [vmem:[%s2 + $0x48] sm:$0xff] %v380
  %397 = vst [vmem:[%s2 + $0x50] sm:$0xff] %v381
  %398 = vst [vmem:[%s2 + $0x58] sm:$0xff] %v382
  %399 = vst [vmem:[%s2 + $0x60] sm:$0xff] %v383
  %400 = vst [vmem:[%s2 + $0x68] sm:$0xff] %v384
  %401 = vst [vmem:[%s2 + $0x70] sm:$0xff] %v385
  %402 = vst [vmem:[%s2 + $0x78] sm:$0xff] %v386
  // Predicated region
  $region14: #{resblock_forward.7} parent=0 // pred_check
    %p403 = pneg %p14
  $region15: #{resblock_forward.7} parent=0 // pred_check_branch
    %405 = sbr.rel (%p403) target = $region17
  $region16: #{resblock_forward.7} parent=0 // pred_region
    %v406 = vld [vmem:[%s2] sm:$0xff]
    %v407 = vld [vmem:[%s2 + $0x8] sm:$0xff]
    %v408 = vld [vmem:[%s2 + $0x10] sm:$0xff]
    %v409 = vld [vmem:[%s2 + $0x18] sm:$0xff]
    %v410 = vld [vmem:[%s2 + $0x20] sm:$0xff]
    %v411 = vld [vmem:[%s2 + $0x28] sm:$0xff]
    %v412 = vld [vmem:[%s2 + $0x30] sm:$0xff]
    %v413 = vld [vmem:[%s2 + $0x38] sm:$0xff]
    %v414 = vld [vmem:[%s2 + $0x40] sm:$0xff]
    %v415 = vld [vmem:[%s2 + $0x48] sm:$0xff]
    %v416 = vld [vmem:[%s2 + $0x50] sm:$0xff]
    %v417 = vld [vmem:[%s2 + $0x58] sm:$0xff]
    %v418 = vld [vmem:[%s2 + $0x60] sm:$0xff]
    %v419 = vld [vmem:[%s2 + $0x68] sm:$0xff]
    %v420 = vld [vmem:[%s2 + $0x70] sm:$0xff]
    %v421 = vld [vmem:[%s2 + $0x78] sm:$0xff]
    %v422 = vadd.f32 %v406, %v407
    %v423 = vadd.f32 %v422, %v408
    %v424 = vadd.f32 %v423, %v409
    %v425 = vadd.f32 %v424, %v410
    %v426 = vadd.f32 %v425, %v411
    %v427 = vadd.f32 %v426, %v412
    %v428 = vadd.f32 %v427, %v413
    %v429 = vadd.f32 %v428, %v414
    %v430 = vadd.f32 %v429, %v415
    %v431 = vadd.f32 %v430, %v416
    %v432 = vadd.f32 %v431, %v417
    %v433 = vadd.f32 %v432, %v418
    %v434 = vadd.f32 %v433, %v419
    %v435 = vadd.f32 %v434, %v420
    %v436 = vadd.f32 %v435, %v421
    %v437 = vrot.slane %v436, 4
    %v438 = vadd.f32 %v436, %v437
    %v439 = vrot.slane %v438, 2
    %v440 = vadd.f32 %v438, %v439
    %v441 = vrot.slane %v440, 1
    %v442 = vadd.f32 %v440, %v441
    %v443 = vmul.f32 %v406, %v406
    %v444 = vmul.f32 %v407, %v407
    %v445 = vmul.f32 %v408, %v408
    %v446 = vmul.f32 %v409, %v409
    %v447 = vmul.f32 %v410, %v410
    %v448 = vmul.f32 %v411, %v411
    %v449 = vmul.f32 %v412, %v412
    %v450 = vmul.f32 %v413, %v413
    %v451 = vmul.f32 %v414, %v414
    %v452 = vmul.f32 %v415, %v415
    %v453 = vmul.f32 %v416, %v416
    %v454 = vmul.f32 %v417, %v417
    %v455 = vmul.f32 %v418, %v418
    %v456 = vmul.f32 %v419, %v419
    %v457 = vmul.f32 %v420, %v420
    %v458 = vmul.f32 %v421, %v421
    %v459 = vadd.f32 %v443, %v444
    %v460 = vadd.f32 %v459, %v445
    %v461 = vadd.f32 %v460, %v446
    %v462 = vadd.f32 %v461, %v447
    %v463 = vadd.f32 %v462, %v448
    %v464 = vadd.f32 %v463, %v449
    %v465 = vadd.f32 %v464, %v450
    %v466 = vadd.f32 %v465, %v451
    %v467 = vadd.f32 %v466, %v452
    %v468 = vadd.f32 %v467, %v453
    %v469 = vadd.f32 %v468, %v454
    %v470 = vadd.f32 %v469, %v455
    %v471 = vadd.f32 %v470, %v456
    %v472 = vadd.f32 %v471, %v457
    %v473 = vadd.f32 %v472, %v458
    %v474 = vrot.slane %v473, 4
    %v475 = vadd.f32 %v473, %v474
    %v476 = vrot.slane %v475, 2
    %v477 = vadd.f32 %v475, %v476
    %v478 = vrot.slane %v477, 1
    %v479 = vadd.f32 %v477, %v478
    %v480 = vlaneseq
    %v481 = vshrl.u32 %v480, 7
    %vm482 = vcmp.eq.s32.totalorder %v481, 0
    %vm483 = vcmp.eq.s32.totalorder %v481, 1
    %v484 = vsel %vm483, %v479, 0.0
    %v485 = vsel %vm482, %v442, %v484
    %486 = vst [vmem:[%s3] sm:$0xff] %v485
  $region17: #{resblock_forward.7} parent=0 // pred_fallthru
    _
  // Predicated region
  $region18: #{resblock_forward.7} parent=0 // pred_check
    _
  $region19: #{resblock_forward.7} parent=0 // pred_check_branch
    %488 = sbr.rel (0) target = $region21
  $region20: #{resblock_forward.7} parent=0 // pred_region
    _
  $region21: #{resblock_forward.7} parent=0 // pred_fallthru
    _
  // Predicated region
  $region22: #{resblock_forward.7} parent=0 // pred_check
    _
  $region23: #{resblock_forward.7} parent=0 // pred_check_branch
    %490 = sbr.rel (0) target = $region25
  $region24: #{resblock_forward.7} parent=0 // pred_region
    _
  $region25: #{resblock_forward.7} parent=0 // pred_fallthru
    _
  // Predicated region
  $region26: #{resblock_forward.7} parent=0 // pred_check
    _
  $region27: #{resblock_forward.7} parent=0 // pred_check_branch
    %492 = sbr.rel (0) target = $region29
  $region28: #{resblock_forward.7} parent=0 // pred_region
    _
  $region29: #{resblock_forward.7} parent=0 // pred_fallthru
    _
  // Predicated region
  $region30: #{resblock_forward.7} parent=0 // pred_check
    _
  $region31: #{resblock_forward.7} parent=0 // pred_check_branch
    %494 = sbr.rel (0) target = $region33
  $region32: #{resblock_forward.7} parent=0 // pred_region
    _
  $region33: #{resblock_forward.7} parent=0 // pred_fallthru
    _

// kernel: resblock_forward.9
$region0: #{resblock_forward.9}
  #allocation0 [shape = 'u32[]', space=smem, size = 0x4, offset = 0x4, fixed_abs, tag = 'smem constant byte address 0x4 - core index']
  #allocation1 [shape = 'u32[144,128]{1,0:T(1,128)}', space=vmem, size = 0x12000, scoped, tag = 'internal scratch']
  %s0 = inlined_call_operand.vmem [shape: f32[128,128], index: 0, kind: input, shape index: {}]
  %s1 = inlined_call_operand.vmem [shape: f32[1,128], index: 1, kind: input, shape index: {}]
  %s2 = inlined_call_operand.vmem [shape: f32[1,128], index: 2, kind: input, shape index: {}]
  %s3 = inlined_call_operand.vmem [shape: f32[128,128], index: 3, kind: input, shape index: {}]
  %s4 = inlined_call_operand.vmem [shape: f32[1,128], index: 4, kind: input, shape index: {}]
  %s5 = inlined_call_operand.vmem [shape: f32[1,128], index: 5, kind: input, shape index: {}]
  %s6 = inlined_call_operand.hbm [shape: f32[128,128], index: 6, kind: output, shape index: {}]
  %s7 = sld [smem:[#allocation0]]
  $region34: #{resblock_forward.9} parent=0
    _
  %s9 = ssub.s32 1, %s7
  %s10 = scalar_select 0, %s9, %s7
  $region1: #{resblock_forward.9} parent=0
    #allocation2 [shape = 'u8[65536]{0}', space=vmem, size = 0x10000, scoped, tag = 'output window, operand 0, single buffered']
    #allocation3 [shape = 's32[1]{0}', space=sflag, size = 0x4, scoped, tag = 'scoped memory for resblock_forward.9']
    %11 = vsyncpa [#allocation3], 0
    // Predicated region
    $region2: #{resblock_forward.9} parent=1 // pred_check
      _
    $region3: #{resblock_forward.9} parent=1 // pred_check_branch
      %13 = sbr.rel (0) target = $region5
    $region4: #{resblock_forward.9} parent=1 // pred_region
      _
    $region5: #{resblock_forward.9} parent=1 // pred_fallthru
      _
    // Predicated region
    $region6: #{resblock_forward.9} parent=1 // pred_check
      _
    $region7: #{resblock_forward.9} parent=1 // pred_check_branch
      %15 = sbr.rel (0) target = $region9
    $region8: #{resblock_forward.9} parent=1 // pred_region
      _
    $region9: #{resblock_forward.9} parent=1 // pred_fallthru
      _
    // Predicated region
    $region10: #{resblock_forward.9} parent=1 // pred_check
      _
    $region11: #{resblock_forward.9} parent=1 // pred_check_branch
      %17 = sbr.rel (0) target = $region13
    $region12: #{resblock_forward.9} parent=1 // pred_region
      _
    $region13: #{resblock_forward.9} parent=1 // pred_fallthru
      _
    // Predicated region
    $region14: #{resblock_forward.9} parent=1 // pred_check
      _
    $region15: #{resblock_forward.9} parent=1 // pred_check_branch
      %19 = sbr.rel (0) target = $region17
    $region16: #{resblock_forward.9} parent=1 // pred_region
      _
    $region17: #{resblock_forward.9} parent=1 // pred_fallthru
      _
    // Predicated region
    $region18: #{resblock_forward.9} parent=1 // pred_check
      _
    $region19: #{resblock_forward.9} parent=1 // pred_check_branch
      %21 = sbr.rel (0) target = $region21
    $region20: #{resblock_forward.9} parent=1 // pred_region
      _
    $region21: #{resblock_forward.9} parent=1 // pred_fallthru
      _
    // Predicated region
    $region22: #{resblock_forward.9} parent=1 // pred_check
      _
    $region23: #{resblock_forward.9} parent=1 // pred_check_branch
      %23 = sbr.rel (0) target = $region25
    $region24: #{resblock_forward.9} parent=1 // pred_region
      _
    $region25: #{resblock_forward.9} parent=1 // pred_fallthru
      _
    %v24 = vld [vmem:[%s0] sm:$0xff]
    %v25 = vld [vmem:[%s0 + $0x8] sm:$0xff]
    %v26 = vld [vmem:[%s0 + $0x10] sm:$0xff]
    %v27 = vld [vmem:[%s0 + $0x18] sm:$0xff]
    %v28 = vld [vmem:[%s0 + $0x20] sm:$0xff]
    %v29 = vld [vmem:[%s0 + $0x28] sm:$0xff]
    %v30 = vld [vmem:[%s0 + $0x30] sm:$0xff]
    %v31 = vld [vmem:[%s0 + $0x38] sm:$0xff]
    %v32 = vld [vmem:[%s0 + $0x40] sm:$0xff]
    %v33 = vld [vmem:[%s0 + $0x48] sm:$0xff]
    %v34 = vld [vmem:[%s0 + $0x50] sm:$0xff]
    %v35 = vld [vmem:[%s0 + $0x58] sm:$0xff]
    %v36 = vld [vmem:[%s0 + $0x60] sm:$0xff]
    %v37 = vld [vmem:[%s0 + $0x68] sm:$0xff]
    %v38 = vld [vmem:[%s0 + $0x70] sm:$0xff]
    %v39 = vld [vmem:[%s0 + $0x78] sm:$0xff]
    %v40 = vld [vmem:[%s1] sm:$0x1]
    %v42 = vlaneseq
    %v43 = vshrl.u32 %v42, 7
    %v44 = vsub.s32 0, %v43
    %v45 = vrot.slane %v40, %v44
    %v47 = vmul.f32 %v24, %v45
    %v48 = vmul.f32 %v25, %v45
    %v49 = vmul.f32 %v26, %v45
    %v50 = vmul.f32 %v27, %v45
    %v51 = vmul.f32 %v28, %v45
    %v52 = vmul.f32 %v29, %v45
    %v53 = vmul.f32 %v30, %v45
    %v54 = vmul.f32 %v31, %v45
    %v55 = vmul.f32 %v32, %v45
    %v56 = vmul.f32 %v33, %v45
    %v57 = vmul.f32 %v34, %v45
    %v58 = vmul.f32 %v35, %v45
    %v59 = vmul.f32 %v36, %v45
    %v60 = vmul.f32 %v37, %v45
    %v61 = vmul.f32 %v38, %v45
    %v62 = vmul.f32 %v39, %v45
    %v63 = vld [vmem:[%s2] sm:$0x1]
    %v65 = vlaneseq
    %v66 = vshrl.u32 %v65, 7
    %v67 = vsub.s32 0, %v66
    %v68 = vrot.slane %v63, %v67
    %v70 = vadd.f32 %v47, %v68
    %v71 = vadd.f32 %v48, %v68
    %v72 = vadd.f32 %v49, %v68
    %v73 = vadd.f32 %v50, %v68
    %v74 = vadd.f32 %v51, %v68
    %v75 = vadd.f32 %v52, %v68
    %v76 = vadd.f32 %v53, %v68
    %v77 = vadd.f32 %v54, %v68
    %v78 = vadd.f32 %v55, %v68
    %v79 = vadd.f32 %v56, %v68
    %v80 = vadd.f32 %v57, %v68
    %v81 = vadd.f32 %v58, %v68
    %v82 = vadd.f32 %v59, %v68
    %v83 = vadd.f32 %v60, %v68
    %v84 = vadd.f32 %v61, %v68
    %v85 = vadd.f32 %v62, %v68
    %v86 = vld [vmem:[%s3] sm:$0xff]
    %v87 = vld [vmem:[%s3 + $0x8] sm:$0xff]
    %v88 = vld [vmem:[%s3 + $0x10] sm:$0xff]
    %v89 = vld [vmem:[%s3 + $0x18] sm:$0xff]
    %v90 = vld [vmem:[%s3 + $0x20] sm:$0xff]
    %v91 = vld [vmem:[%s3 + $0x28] sm:$0xff]
    %v92 = vld [vmem:[%s3 + $0x30] sm:$0xff]
    %v93 = vld [vmem:[%s3 + $0x38] sm:$0xff]
    %v94 = vld [vmem:[%s3 + $0x40] sm:$0xff]
    %v95 = vld [vmem:[%s3 + $0x48] sm:$0xff]
    %v96 = vld [vmem:[%s3 + $0x50] sm:$0xff]
    %v97 = vld [vmem:[%s3 + $0x58] sm:$0xff]
    %v98 = vld [vmem:[%s3 + $0x60] sm:$0xff]
    %v99 = vld [vmem:[%s3 + $0x68] sm:$0xff]
    %v100 = vld [vmem:[%s3 + $0x70] sm:$0xff]
    %v101 = vld [vmem:[%s3 + $0x78] sm:$0xff]
    %v102 = vld [vmem:[%s4] sm:$0x1]
    %v104 = vlaneseq
    %v105 = vshrl.u32 %v104, 7
    %v106 = vsub.s32 0, %v105
    %v107 = vrot.slane %v102, %v106
    %v109 = vmul.f32 %v86, %v107
    %v110 = vmul.f32 %v87, %v107
    %v111 = vmul.f32 %v88, %v107
    %v112 = vmul.f32 %v89, %v107
    %v113 = vmul.f32 %v90, %v107
    %v114 = vmul.f32 %v91, %v107
    %v115 = vmul.f32 %v92, %v107
    %v116 = vmul.f32 %v93, %v107
    %v117 = vmul.f32 %v94, %v107
    %v118 = vmul.f32 %v95, %v107
    %v119 = vmul.f32 %v96, %v107
    %v120 = vmul.f32 %v97, %v107
    %v121 = vmul.f32 %v98, %v107
    %v122 = vmul.f32 %v99, %v107
    %v123 = vmul.f32 %v100, %v107
    %v124 = vmul.f32 %v101, %v107
    %v125 = vadd.f32 %v70, %v109
    %v126 = vadd.f32 %v71, %v110
    %v127 = vadd.f32 %v72, %v111
    %v128 = vadd.f32 %v73, %v112
    %v129 = vadd.f32 %v74, %v113
    %v130 = vadd.f32 %v75, %v114
    %v131 = vadd.f32 %v76, %v115
    %v132 = vadd.f32 %v77, %v116
    %v133 = vadd.f32 %v78, %v117
    %v134 = vadd.f32 %v79, %v118
    %v135 = vadd.f32 %v80, %v119
    %v136 = vadd.f32 %v81, %v120
    %v137 = vadd.f32 %v82, %v121
    %v138 = vadd.f32 %v83, %v122
    %v139 = vadd.f32 %v84, %v123
    %v140 = vadd.f32 %v85, %v124
    %v141 = vld [vmem:[%s5] sm:$0x1]
    %v143 = vlaneseq
    %v144 = vshrl.u32 %v143, 7
    %v145 = vsub.s32 0, %v144
    %v146 = vrot.slane %v141, %v145
    %v148 = vadd.f32 %v125, %v146
    %v149 = vadd.f32 %v126, %v146
    %v150 = vadd.f32 %v127, %v146
    %v151 = vadd.f32 %v128, %v146
    %v152 = vadd.f32 %v129, %v146
    %v153 = vadd.f32 %v130, %v146
    %v154 = vadd.f32 %v131, %v146
    %v155 = vadd.f32 %v132, %v146
    %v156 = vadd.f32 %v133, %v146
    %v157 = vadd.f32 %v134, %v146
    %v158 = vadd.f32 %v135, %v146
    %v159 = vadd.f32 %v136, %v146
    %v160 = vadd.f32 %v137, %v146
    %v161 = vadd.f32 %v138, %v146
    %v162 = vadd.f32 %v139, %v146
    %v163 = vadd.f32 %v140, %v146
    %v164 = vmax.f32 %v148, 0.0
    %v165 = vmax.f32 %v149, 0.0
    %v166 = vmax.f32 %v150, 0.0
    %v167 = vmax.f32 %v151, 0.0
    %v168 = vmax.f32 %v152, 0.0
    %v169 = vmax.f32 %v153, 0.0
    %v170 = vmax.f32 %v154, 0.0
    %v171 = vmax.f32 %v155, 0.0
    %v172 = vmax.f32 %v156, 0.0
    %v173 = vmax.f32 %v157, 0.0
    %v174 = vmax.f32 %v158, 0.0
    %v175 = vmax.f32 %v159, 0.0
    %v176 = vmax.f32 %v160, 0.0
    %v177 = vmax.f32 %v161, 0.0
    %v178 = vmax.f32 %v162, 0.0
    %v179 = vmax.f32 %v163, 0.0
    %180 = vst [vmem:[#allocation2] sm:$0xff] %v164
    %181 = vst [vmem:[#allocation2 + $0x8] sm:$0xff] %v165
    %182 = vst [vmem:[#allocation2 + $0x10] sm:$0xff] %v166
    %183 = vst [vmem:[#allocation2 + $0x18] sm:$0xff] %v167
    %184 = vst [vmem:[#allocation2 + $0x20] sm:$0xff] %v168
    %185 = vst [vmem:[#allocation2 + $0x28] sm:$0xff] %v169
    %186 = vst [vmem:[#allocation2 + $0x30] sm:$0xff] %v170
    %187 = vst [vmem:[#allocation2 + $0x38] sm:$0xff] %v171
    %188 = vst [vmem:[#allocation2 + $0x40] sm:$0xff] %v172
    %189 = vst [vmem:[#allocation2 + $0x48] sm:$0xff] %v173
    %190 = vst [vmem:[#allocation2 + $0x50] sm:$0xff] %v174
    %191 = vst [vmem:[#allocation2 + $0x58] sm:$0xff] %v175
    %192 = vst [vmem:[#allocation2 + $0x60] sm:$0xff] %v176
    %193 = vst [vmem:[#allocation2 + $0x68] sm:$0xff] %v177
    %194 = vst [vmem:[#allocation2 + $0x70] sm:$0xff] %v178
    %195 = vst [vmem:[#allocation2 + $0x78] sm:$0xff] %v179
    // Predicated region
    $region26: #{resblock_forward.9} parent=1 // pred_check
      _
    $region27: #{resblock_forward.9} parent=1 // pred_check_branch
      %197 = sbr.rel (0) target = $region29
    $region28: #{resblock_forward.9} parent=1 // pred_region
      %s199 = ssub.s32 2048, 2048
      %200 = vsyncadd [#allocation3], %s199
      %s201 = sshll.u32 [#allocation2], 4
      %s202 = int_to_ptr.vmem [resolvable:$true] %s201
      %207 = dma.vmem_to_hbm [thread:$0]  %s202, 2048, %s6, [#allocation3], 128, 128, 8
    $region29: #{resblock_forward.9} parent=1 // pred_fallthru
      _
    // Predicated region
    $region30: #{resblock_forward.9} parent=1 // pred_check
      _
    $region31: #{resblock_forward.9} parent=1 // pred_check_branch
      %209 = sbr.rel (0) target = $region33
    $region32: #{resblock_forward.9} parent=1 // pred_region
      %210 = dma.done [#allocation3], 2048
    $region33: #{resblock_forward.9} parent=1 // pred_fallthru
      _
    %211 = vsyncpa [#allocation3], 1

</llo_original>
